<compile_context>
chip_gen: v7x
topology: tpu7x:2x2x1
jax: 0.10.0
libtpu: 0.0.40
codegen_flags: <defaults>
</compile_context>

<pallas_src>
import functools

import numpy as np
import jax
import jax.numpy as jnp
from jax.experimental import pallas as pl
from jax.experimental.pallas import tpu as pltpu

# ----------------------------- model config (from SwinUnet.__init__) -----------------
IMG = 224          # window_size=7 with 4 stages + patch_size=4 forces 224x224 input
PATCH = 4
IN_CHANS = 3
NUM_CLASSES = 32
EMBED_DIM = 96
DEPTHS = [2, 2, 6, 2]
NUM_HEADS = [3, 6, 12, 24]
WINDOW = 7
PR = IMG // PATCH  # 56

NEG_BIAS = -1e9    # additive mask value for padded attention keys


# ----------------------------- small helpers -----------------------------------------
def _round_up(x, m):
    return ((x + m - 1) // m) * m


def _pad_axis(x, mult, axis):
    pad = (-x.shape[axis]) % mult
    if pad == 0:
        return x
    widths = [(0, 0)] * x.ndim
    widths[axis] = (0, pad)
    return jnp.pad(x, widths)


def _tile_m(M):
    """Row tile: single tile (rounded to 8 sublanes) for small M, else 256/512."""
    if M <= 1024:
        return _round_up(M, 8)
    if M % 512 == 0:
        return 512
    return 256


def _tile_n(N):
    """Column tile: lane-dense (multiple of 128), single tile when small."""
    Np = _round_up(N, 128)
    if Np <= 512:
        return Np, Np
    for tn in (512, 384, 256, 128):
        if Np % tn == 0:
            return Np, tn
    return Np, 128  # unreachable (Np % 128 == 0)


def _pick_bw(n, cap=16):
    """Largest divisor of n that is <= cap (windows batched per attention grid step)."""
    bw = 1
    for c in range(1, min(n, cap) + 1):
        if n % c == 0:
            bw = c
    return bw


# ----------------------------- Pallas kernels ----------------------------------------
def _apply_gelu(acc):
    # exact (erf-based) GELU, matching torch.nn.GELU default
    return 0.5 * acc * (1.0 + jax.lax.erf(acc * jnp.float32(0.7071067811865476)))


def _linear_kernel(a_ref, w_ref, bias_ref, o_ref, *, act):
    a = a_ref[...].astype(jnp.bfloat16)                       # bf16 MXU operands
    acc = jnp.dot(a, w_ref[...], preferred_element_type=jnp.float32)
    acc = acc + bias_ref[...]
    if act == "gelu":
        acc = _apply_gelu(acc)
    o_ref[...] = acc


def _ln_linear_kernel(x_ref, g_ref, be_ref, w_ref, bias_ref, o_ref, *, act, eps):
    # fused LayerNorm (f32 statistics) + Linear (bf16 MXU, f32 accumulation)
    x = x_ref[...]
    mu = jnp.mean(x, axis=-1, keepdims=True)
    xc = x - mu
    var = jnp.mean(xc * xc, axis=-1, keepdims=True)
    y = xc * jax.lax.rsqrt(var + eps) * g_ref[...] + be_ref[...]
    acc = jnp.dot(y.astype(jnp.bfloat16), w_ref[...],
                  preferred_element_type=jnp.float32)
    acc = acc + bias_ref[...]
    if act == "gelu":
        acc = _apply_gelu(acc)
    o_ref[...] = acc


@functools.lru_cache(maxsize=None)
def _linear_call(Mp, K, Np, tm, tn, act, has_ln, eps):
    if has_ln:
        kernel = functools.partial(_ln_linear_kernel, act=act, eps=eps)
        in_specs = [
            pl.BlockSpec((tm, K), lambda i, j: (i, 0)),
            pl.BlockSpec((1, K), lambda i, j: (0, 0)),
            pl.BlockSpec((1, K), lambda i, j: (0, 0)),
            pl.BlockSpec((K, tn), lambda i, j: (0, j)),
            pl.BlockSpec((1, tn), lambda i, j: (0, j)),
        ]
    else:
        kernel = functools.partial(_linear_kernel, act=act)
        in_specs = [
            pl.BlockSpec((tm, K), lambda i, j: (i, 0)),
            pl.BlockSpec((K, tn), lambda i, j: (0, j)),
            pl.BlockSpec((1, tn), lambda i, j: (0, j)),
        ]
    return pl.pallas_call(
        kernel,
        out_shape=jax.ShapeDtypeStruct((Mp, Np), jnp.float32),
        grid=(Mp // tm, Np // tn),
        in_specs=in_specs,
        out_specs=pl.BlockSpec((tm, tn), lambda i, j: (i, j)),
        compiler_params=pltpu.CompilerParams(
            dimension_semantics=("parallel", "parallel")),
    )


def pallas_linear(x, w, b=None, act=None, ln=None, eps=1e-5):
    """x: (..., K); w: (N, K) torch Linear layout (bf16 ok); b: (N,) or None.
    If ln=(gamma, beta) the LayerNorm over K is fused in front of the matmul."""
    K = x.shape[-1]
    N = w.shape[0]
    a = x.reshape(-1, K).astype(jnp.float32)
    M = a.shape[0]
    tm = _tile_m(M)
    Np, tn = _tile_n(N)
    a_p = _pad_axis(a, tm, 0)
    w_p = _pad_axis(jnp.transpose(w).astype(jnp.bfloat16), tn, 1)
    bias = b if b is not None else jnp.zeros((N,), jnp.float32)
    bias_p = _pad_axis(bias.reshape(1, N).astype(jnp.float32), tn, 1)
    Mp = a_p.shape[0]
    call = _linear_call(Mp, K, Np, tm, tn, act, ln is not None, float(eps))
    if ln is None:
        out = call(a_p, w_p, bias_p)
    else:
        g, be = ln
        out = call(a_p, g.reshape(1, K).astype(jnp.float32),
                   be.reshape(1, K).astype(jnp.float32), w_p, bias_p)
    return out[:M, :N].reshape(x.shape[:-1] + (N,))


def _layernorm_kernel(x_ref, g_ref, b_ref, o_ref, *, eps):
    x = x_ref[...]
    mu = jnp.mean(x, axis=-1, keepdims=True)
    xc = x - mu
    var = jnp.mean(xc * xc, axis=-1, keepdims=True)
    y = xc * jax.lax.rsqrt(var + eps)
    o_ref[...] = y * g_ref[...] + b_ref[...]


@functools.lru_cache(maxsize=None)
def _layernorm_call(Mp, C, tm, eps):
    return pl.pallas_call(
        functools.partial(_layernorm_kernel, eps=eps),
        out_shape=jax.ShapeDtypeStruct((Mp, C), jnp.float32),
        grid=(Mp // tm,),
        in_specs=[
            pl.BlockSpec((tm, C), lambda i: (i, 0)),
            pl.BlockSpec((1, C), lambda i: (0, 0)),
            pl.BlockSpec((1, C), lambda i: (0, 0)),
        ],
        out_specs=pl.BlockSpec((tm, C), lambda i: (i, 0)),
        compiler_params=pltpu.CompilerParams(dimension_semantics=("parallel",)),
    )


def pallas_layernorm(x, g, b, eps=1e-5):
    C = x.shape[-1]
    a = x.reshape(-1, C).astype(jnp.float32)
    M = a.shape[0]
    tm = _tile_m(M)
    a_p = _pad_axis(a, tm, 0)
    out = _layernorm_call(a_p.shape[0], C, tm, float(eps))(
        a_p, g.reshape(1, C).astype(jnp.float32), b.reshape(1, C).astype(jnp.float32))
    return out[:M].reshape(x.shape)


def _attn_kernel(q_ref, k_ref, v_ref, bias_ref, o_ref, *, scale):
    # q/k/v blocks: (BW, nH, N, d); bias block: (1 or BW, nH, N, N)
    bw = q_ref.shape[0]
    nb = bias_ref.shape[0]
    for i in range(bw):                                        # static unroll over windows
        q = q_ref[i].astype(jnp.bfloat16)                      # (nH, N, d)
        k = k_ref[i].astype(jnp.bfloat16)
        v = v_ref[i].astype(jnp.bfloat16)
        s = jnp.einsum("hqd,hkd->hqk", q, k, preferred_element_type=jnp.float32)
        s = s * scale + bias_ref[i if nb > 1 else 0]           # rel-pos bias (+shift mask)
        s = s - jnp.max(s, axis=-1, keepdims=True)
        p = jnp.exp(s)
        r = pl.reciprocal(jnp.sum(p, axis=-1, keepdims=True), approx=True)
        p = (p * r).astype(jnp.bfloat16)
        o_ref[i] = jnp.einsum("hqk,hkd->hqd", p, v, preferred_element_type=jnp.float32)


@functools.lru_cache(maxsize=None)
def _attn_call(B_, nH, N, d, BW, nB, scale):
    qkv_spec = pl.BlockSpec((BW, nH, N, d), lambda i: (i, 0, 0, 0))
    if nB == 1:
        bias_spec = pl.BlockSpec((1, nH, N, N), lambda i: (0, 0, 0, 0))
    else:
        nblk = nB // BW
        if nblk == 1:
            bias_spec = pl.BlockSpec((BW, nH, N, N), lambda i: (0, 0, 0, 0))
        else:
            bias_spec = pl.BlockSpec((BW, nH, N, N), lambda i: (i % nblk, 0, 0, 0))
    return pl.pallas_call(
        functools.partial(_attn_kernel, scale=scale),
        out_shape=jax.ShapeDtypeStruct((B_, nH, N, d), jnp.float32),
        grid=(B_ // BW,),
        in_specs=[qkv_spec, qkv_spec, qkv_spec, bias_spec],
        out_specs=qkv_spec,
        compiler_params=pltpu.CompilerParams(dimension_semantics=("parallel",)),
    )


def pallas_window_attention(q, k, v, bias, scale, nW):
    """q/k/v: (B_, nH, N, d); bias: (1, nH, N, N) or (nW, nH, N, N)."""
    B_, nH, N, d = q.shape
    nB = bias.shape[0]
    BW = _pick_bw(nW if nB > 1 else B_)   # divides B_ (and nW for the masked case)
    return _attn_call(B_, nH, N, d, BW, nB, float(scale))(q, k, v, bias)


# ----------------------------- static (numpy) constants ------------------------------
@functools.lru_cache(maxsize=None)
def _relative_position_index(ws):
    coords = np.stack(np.meshgrid(np.arange(ws), np.arange(ws), indexing="ij"))
    cf = coords.reshape(2, -1)
    rel = cf[:, :, None] - cf[:, None, :]
    rel = rel.transpose(1, 2, 0).astype(np.int64)
    rel[:, :, 0] += ws - 1
    rel[:, :, 1] += ws - 1
    rel[:, :, 0] *= 2 * ws - 1
    return rel.sum(-1)  # (N, N)


def _window_partition_np(x, ws):
    B, H, W, C = x.shape
    x = x.reshape(B, H // ws, ws, W // ws, ws, C)
    return x.transpose(0, 1, 3, 2, 4, 5).reshape(-1, ws, ws, C)


@functools.lru_cache(maxsize=None)
def _attn_mask_np(H, W, ws, shift):
    img = np.zeros((1, H, W, 1), np.float32)
    cnt = 0
    for h in (slice(0, -ws), slice(-ws, -shift), slice(-shift, None)):
        for w in (slice(0, -ws), slice(-ws, -shift), slice(-shift, None)):
            img[:, h, w, :] = cnt
            cnt += 1
    mw = _window_partition_np(img, ws).reshape(-1, ws * ws)
    am = mw[:, None, :] - mw[:, :, None]
    return np.where(am != 0, -100.0, 0.0).astype(np.float32)  # (nW, N, N)


# ----------------------------- JAX glue (reshapes / partitions) -----------------------
def window_partition(x, ws):
    B, H, W, C = x.shape
    x = x.reshape(B, H // ws, ws, W // ws, ws, C)
    return x.transpose(0, 1, 3, 2, 4, 5).reshape(-1, ws, ws, C)


def window_reverse(windows, ws, H, W):
    C = windows.shape[-1]
    B = windows.shape[0] // ((H // ws) * (W // ws))
    x = windows.reshape(B, H // ws, W // ws, ws, ws, C)
    return x.transpose(0, 1, 3, 2, 4, 5).reshape(B, H, W, C)


def swin_block_impl(x, p, H, W, num_heads, window_size, shift_size):
    B, L, C = x.shape
    shortcut = x

    # LayerNorm(norm1) is fused into the qkv projection; LN is per-token so it commutes
    # with the roll / window-partition permutation applied here first.
    xs = x.reshape(B, H, W, C)
    if shift_size > 0:
        xs = jnp.roll(xs, shift=(-shift_size, -shift_size), axis=(1, 2))
    xw = window_partition(xs, window_size).reshape(-1, window_size * window_size, C)
    B_, N, _ = xw.shape
    nW = (H // window_size) * (W // window_size)
    hd = C // num_heads

    qkv = pallas_linear(xw, p["qkv_w"], p["qkv_b"],
                        ln=(p["norm1_g"], p["norm1_b"]))          # (B_, N, 3C)
    qkv = qkv.reshape(B_, N, 3, num_heads, hd).transpose(2, 0, 3, 1, 4)
    q, k, v = qkv[0], qkv[1], qkv[2]                              # (B_, nH, N, hd)

    # relative-position bias (+ shift mask); not broadcast to every window.
    rel_idx = _relative_position_index(window_size)
    rpb = p["rpb_table"][rel_idx.reshape(-1)].reshape(N, N, num_heads)
    bias = jnp.transpose(rpb, (2, 0, 1))[None]                    # (1, nH, N, N)
    if shift_size > 0:
        mask = jnp.asarray(_attn_mask_np(H, W, window_size, shift_size))
        bias = bias + mask[:, None]                               # (nW, nH, N, N)

    # pad N (49) up to a sublane multiple (56) for clean vreg tiling.
    Np_ = _round_up(N, 8)
    pad_n = Np_ - N
    if pad_n:
        q = jnp.pad(q, ((0, 0), (0, 0), (0, pad_n), (0, 0)))
        k = jnp.pad(k, ((0, 0), (0, 0), (0, pad_n), (0, 0)))
        v = jnp.pad(v, ((0, 0), (0, 0), (0, pad_n), (0, 0)))
        bias = jnp.pad(bias, ((0, 0), (0, 0), (0, pad_n), (0, pad_n)),
                       constant_values=NEG_BIAS)

    attn = pallas_window_attention(q, k, v, bias, hd ** -0.5, nW)  # (B_, nH, Np_, hd)
    if pad_n:
        attn = attn[:, :, :N, :]
    attn = attn.transpose(0, 2, 1, 3).reshape(B_, N, C)
    attn = pallas_linear(attn, p["proj_w"], p["proj_b"])

    aw = attn.reshape(-1, window_size, window_size, C)
    xs = window_reverse(aw, window_size, H, W)
    if shift_size > 0:
        xs = jnp.roll(xs, shift=(shift_size, shift_size), axis=(1, 2))
    x = shortcut + xs.reshape(B, H * W, C)

    # MLP: LayerNorm(norm2) fused into fc1.
    y = pallas_linear(x, p["fc1_w"], p["fc1_b"], act="gelu",
                      ln=(p["norm2_g"], p["norm2_b"]))
    y = pallas_linear(y, p["fc2_w"], p["fc2_b"])
    return x + y


def patch_embed_impl(x, p):
    B, C, H, W = x.shape
    x = x.reshape(B, C, H // PATCH, PATCH, W // PATCH, PATCH)
    x = x.transpose(0, 2, 4, 1, 3, 5).reshape(B * (H // PATCH) * (W // PATCH),
                                              C * PATCH * PATCH)
    w = p["proj_w"].reshape(EMBED_DIM, C * PATCH * PATCH)
    out = pallas_linear(x, w, p["proj_b"]).reshape(B, (H // PATCH) * (W // PATCH),
                                                   EMBED_DIM)
    return pallas_layernorm(out, p["norm_g"], p["norm_b"])


def patch_merging_impl(x, p, H, W):
    B, L, C = x.shape
    x = x.reshape(B, H, W, C)
    x0 = x[:, 0::2, 0::2, :]
    x1 = x[:, 1::2, 0::2, :]
    x2 = x[:, 0::2, 1::2, :]
    x3 = x[:, 1::2, 1::2, :]
    x = jnp.concatenate([x0, x1, x2, x3], axis=-1).reshape(B, (H // 2) * (W // 2), 4 * C)
    # norm fused into the reduction linear
    return pallas_linear(x, p["red_w"], None, ln=(p["norm_g"], p["norm_b"]))


def patch_expand_impl(x, p, H, W):
    B = x.shape[0]
    x = pallas_linear(x, p["expand_w"], None)        # (B, H*W, 2*dim)
    C = x.shape[-1]
    x = x.reshape(B, H, W, 2, 2, C // 4)
    x = x.transpose(0, 1, 3, 2, 4, 5).reshape(B, 4 * H * W, C // 4)
    return pallas_layernorm(x, p["norm_g"], p["norm_b"])


def final_patch_expand_x4(x, p, H, W):
    B = x.shape[0]
    x = pallas_linear(x, p["expand_w"], None)        # (B, H*W, 16*dim)
    C = x.shape[-1]
    x = x.reshape(B, H, W, 4, 4, C // 16)
    x = x.transpose(0, 1, 3, 2, 4, 5).reshape(B, 16 * H * W, C // 16)
    return pallas_layernorm(x, p["norm_g"], p["norm_b"])


def concat_linear_impl(x, skip, w, b):
    x = jnp.concatenate([x, skip], axis=-1)
    return pallas_linear(x, w, b)


def final_head_impl(x, norm_up_g, norm_up_b, fe, output_w):
    B = x.shape[0]
    x = pallas_layernorm(x, norm_up_g, norm_up_b)
    x = final_patch_expand_x4(x, fe, PR, PR)             # (B, 224*224, 96)
    x = x.reshape(B, 4 * PR, 4 * PR, EMBED_DIM)
    w_out = output_w.reshape(NUM_CLASSES, EMBED_DIM)
    logits = pallas_linear(x, w_out, None)               # (B, 224, 224, 32)
    return jnp.transpose(logits, (0, 3, 1, 2))           # NCHW, like PyTorch


# ----------------------------- jitted entry points -----------------------------------
# per-module jit: fuses all glue between pallas_calls; identical block shapes across
# the encoder/decoder reuse the same compiled program.
_patch_embed_jit = jax.jit(patch_embed_impl)
_block_jit = jax.jit(
    swin_block_impl,
    static_argnames=("H", "W", "num_heads", "window_size", "shift_size"))
_patch_merge_jit = jax.jit(patch_merging_impl, static_argnames=("H", "W"))
_patch_expand_jit = jax.jit(patch_expand_impl, static_argnames=("H", "W"))
_concat_linear_jit = jax.jit(concat_linear_impl)
_norm_jit = jax.jit(pallas_layernorm)
_final_jit = jax.jit(final_head_impl)


def swin_block(x, p, H, W, num_heads, window_size, shift_size):
    # resolve the window/shift override before jit so identical configs share a cache key
    if min(H, W) <= window_size:
        shift_size = 0
        window_size = min(H, W)
    return _block_jit(x, p, H=H, W=W, num_heads=num_heads,
                      window_size=window_size, shift_size=shift_size)


def swin_unet_forward(x, p):
    if x.shape[1] == 1:                              # matches x.repeat(1, 3, 1, 1)
        x = jnp.tile(x, (1, 3, 1, 1))
    x = _patch_embed_jit(x, p["patch_embed"])        # (B, 3136, 96)

    # ---------------- encoder ----------------
    x_down = []
    res = PR
    for i in range(4):
        x_down.append(x)
        for bi, bp in enumerate(p["enc"][i]["blocks"]):
            shift = 0 if bi % 2 == 0 else WINDOW // 2
            x = swin_block(x, bp, res, res, NUM_HEADS[i], WINDOW, shift)
        if "down" in p["enc"][i]:
            x = _patch_merge_jit(x, p["enc"][i]["down"], H=res, W=res)
            res //= 2
    x = _norm_jit(x, p["norm_g"], p["norm_b"])       # bottleneck norm (768)

    # ---------------- decoder ----------------
    for i in range(4):
        if i == 0:
            x = _patch_expand_jit(x, p["up"][0], H=res, W=res)   # 7->14, 768->384
            res *= 2
        else:
            x = _concat_linear_jit(x, x_down[3 - i],
                                   p["concat"][i]["w"], p["concat"][i]["b"])
            for bi, bp in enumerate(p["up"][i]["blocks"]):
                shift = 0 if bi % 2 == 0 else WINDOW // 2
                x = swin_block(x, bp, res, res, NUM_HEADS[3 - i], WINDOW, shift)
            if "upsample" in p["up"][i]:
                x = _patch_expand_jit(x, p["up"][i]["upsample"], H=res, W=res)
                res *= 2

    # ---------------- norm_up + up_x4 + 1x1 conv head ----------------
    return _final_jit(x, p["norm_up_g"], p["norm_up_b"],
                      p["final_expand"], p["output_w"])


# ----------------------------- parameter init (deterministic) -------------------------
class _KeyGen:
    def __init__(self, seed):
        self._key = jax.random.PRNGKey(seed)

    def __call__(self):
        self._key, sub = jax.random.split(self._key)
        return sub


def _w(kg, shape, std=0.02, dtype=jnp.bfloat16):
    # matmul weights are stored in bf16 (MXU operands); f32 where used additively
    return (jax.random.normal(kg(), shape, jnp.float32) * std).astype(dtype)


def _zeros(shape):
    return jnp.zeros(shape, jnp.float32)


def _ones(shape):
    return jnp.ones(shape, jnp.float32)


def make_block_params(kg, dim, num_heads, window_size):
    return {
        "norm1_g": _ones((dim,)), "norm1_b": _zeros((dim,)),
        "qkv_w": _w(kg, (3 * dim, dim)), "qkv_b": _zeros((3 * dim,)),
        "rpb_table": _w(kg, ((2 * window_size - 1) ** 2, num_heads),
                        dtype=jnp.float32),
        "proj_w": _w(kg, (dim, dim)), "proj_b": _zeros((dim,)),
        "norm2_g": _ones((dim,)), "norm2_b": _zeros((dim,)),
        "fc1_w": _w(kg, (4 * dim, dim)), "fc1_b": _zeros((4 * dim,)),
        "fc2_w": _w(kg, (dim, 4 * dim)), "fc2_b": _zeros((dim,)),
    }


def init_params(seed=0):
    kg = _KeyGen(seed)
    p = {
        "patch_embed": {
            "proj_w": _w(kg, (EMBED_DIM, IN_CHANS, PATCH, PATCH)),
            "proj_b": _zeros((EMBED_DIM,)),
            "norm_g": _ones((EMBED_DIM,)), "norm_b": _zeros((EMBED_DIM,)),
        }
    }
    enc = []
    for i in range(4):
        dim = EMBED_DIM * (2 ** i)
        layer = {"blocks": [make_block_params(kg, dim, NUM_HEADS[i], WINDOW)
                            for _ in range(DEPTHS[i])]}
        if i < 3:
            layer["down"] = {"norm_g": _ones((4 * dim,)), "norm_b": _zeros((4 * dim,)),
                             "red_w": _w(kg, (2 * dim, 4 * dim))}
        enc.append(layer)
    p["enc"] = enc
    p["norm_g"] = _ones((8 * EMBED_DIM,))
    p["norm_b"] = _zeros((8 * EMBED_DIM,))

    ups, concat = [], []
    for i in range(4):
        dim = EMBED_DIM * (2 ** (3 - i))
        if i == 0:
            ups.append({"expand_w": _w(kg, (2 * dim, dim)),
                        "norm_g": _ones((dim // 2,)), "norm_b": _zeros((dim // 2,))})
            concat.append(None)
        else:
            concat.append({"w": _w(kg, (dim, 2 * dim)), "b": _zeros((dim,))})
            layer = {"blocks": [make_block_params(kg, dim, NUM_HEADS[3 - i], WINDOW)
                                for _ in range(DEPTHS[3 - i])]}
            if i < 3:
                layer["upsample"] = {"expand_w": _w(kg, (2 * dim, dim)),
                                     "norm_g": _ones((dim // 2,)),
                                     "norm_b": _zeros((dim // 2,))}
            ups.append(layer)
    p["up"] = ups
    p["concat"] = concat
    p["norm_up_g"] = _ones((EMBED_DIM,))
    p["norm_up_b"] = _zeros((EMBED_DIM,))
    p["final_expand"] = {"expand_w": _w(kg, (16 * EMBED_DIM, EMBED_DIM)),
                         "norm_g": _ones((EMBED_DIM,)), "norm_b": _zeros((EMBED_DIM,))}
    p["output_w"] = _w(kg, (NUM_CLASSES, EMBED_DIM, 1, 1))
    return p


# ----------------------------- main ---------------------------------------------------
if __name__ == "__main__":
    key = jax.random.PRNGKey(0)
    # Smallest input the hardcoded config (patch=4, window=7, 4 stages) admits: 224x224.
    x = jax.random.normal(key, (1, IN_CHANS, IMG, IMG), jnp.float32)
    params = init_params(seed=0)
    logits = swin_unet_forward(x, params)
    logits = jax.block_until_ready(logits)
    assert logits.shape == (1, NUM_CLASSES, IMG, IMG), logits.shape
    assert bool(jnp.all(jnp.isfinite(logits)))
    print("KERNEL_OK")
</pallas_src>

<mosaic_0001>
module attributes {stable_mosaic.version = 11 : i64} {
  func.func @_linear_kernel(%arg0: i32, %arg1: i32, %arg2: memref<256x48xf32, #tpu.memory_space<vmem>>, %arg3: memref<48x128xbf16, #tpu.memory_space<vmem>>, %arg4: memref<1x128xf32, #tpu.memory_space<vmem>>, %arg5: memref<256x128xf32, #tpu.memory_space<vmem>>) attributes {dimension_semantics = [#tpu.dimension_semantics<parallel>, #tpu.dimension_semantics<parallel>], iteration_bounds = array<i64: 13, 1>, scalar_prefetch = 0 : i64, scratch_operands = 0 : i64, tpu.core_type = #tpu.core_type<tc>, window_params = [{transform_indices = @transform_0, window_bounds = array<i64: 256, 48>}, {transform_indices = @transform_1, window_bounds = array<i64: 48, 128>}, {transform_indices = @transform_2, window_bounds = array<i64: 1, 128>}, {transform_indices = @transform_3, window_bounds = array<i64: 256, 128>}]} {
    %c0 = arith.constant 0 : index
    %c0_0 = arith.constant 0 : index
    %0 = vector.load %arg2[%c0, %c0_0] : memref<256x48xf32, #tpu.memory_space<vmem>>, vector<256x48xf32>
    %1 = arith.truncf %0 : vector<256x48xf32> to vector<256x48xbf16>
    %c0_1 = arith.constant 0 : index
    %c0_2 = arith.constant 0 : index
    %2 = vector.load %arg3[%c0_1, %c0_2] : memref<48x128xbf16, #tpu.memory_space<vmem>>, vector<48x128xbf16>
    %cst = arith.constant dense<0.000000e+00> : vector<256x128xf32>
    %3 = tpu.matmul %1, %2, %cst {dimension_numbers = #tpu.dot_dimension_numbers<[1], [0], [0], [1], [0, 0, 1, 1], [], []>} : vector<256x48xbf16>, vector<48x128xbf16>, vector<256x128xf32> -> vector<256x128xf32>
    %c0_3 = arith.constant 0 : index
    %c0_4 = arith.constant 0 : index
    %4 = vector.load %arg4[%c0_3, %c0_4] : memref<1x128xf32, #tpu.memory_space<vmem>>, vector<1x128xf32>
    %5 = vector.broadcast %4 : vector<1x128xf32> to vector<256x128xf32>
    %6 = arith.addf %3, %5 : vector<256x128xf32>
    %c0_5 = arith.constant 0 : index
    %c0_6 = arith.constant 0 : index
    %7 = vector.load %arg5[%c0_5, %c0_6] : memref<256x128xf32, #tpu.memory_space<vmem>>, vector<256x128xf32>
    tpu.vector_store %arg5[%c0_5, %c0_6], %6 {strides = array<i32>} : memref<256x128xf32, #tpu.memory_space<vmem>>, vector<256x128xf32>,
    return
  }
  func.func @transform_0(%arg0: i32, %arg1: i32) -> (i32, i32) {
    %c0_i32 = arith.constant 0 : i32
    %c0_i32_0 = arith.constant 0 : i32
    return %arg0, %c0_i32 : i32, i32
  }
  func.func @transform_1(%arg0: i32, %arg1: i32) -> (i32, i32) {
    %c0_i32 = arith.constant 0 : i32
    %c0_i32_0 = arith.constant 0 : i32
    return %c0_i32, %arg1 : i32, i32
  }
  func.func @transform_2(%arg0: i32, %arg1: i32) -> (i32, i32) {
    %c0_i32 = arith.constant 0 : i32
    %c0_i32_0 = arith.constant 0 : i32
    return %c0_i32, %arg1 : i32, i32
  }
  func.func @transform_3(%arg0: i32, %arg1: i32) -> (i32, i32) {
    %c0_i32 = arith.constant 0 : i32
    return %arg0, %arg1 : i32, i32
  }
}

module attributes {stable_mosaic.version = 11 : i64} {
  func.func @_layernorm_kernel(%arg0: i32, %arg1: memref<256x96xf32, #tpu.memory_space<vmem>>, %arg2: memref<1x96xf32, #tpu.memory_space<vmem>>, %arg3: memref<1x96xf32, #tpu.memory_space<vmem>>, %arg4: memref<256x96xf32, #tpu.memory_space<vmem>>) attributes {dimension_semantics = [#tpu.dimension_semantics<parallel>], iteration_bounds = array<i64: 13>, scalar_prefetch = 0 : i64, scratch_operands = 0 : i64, tpu.core_type = #tpu.core_type<tc>, window_params = [{transform_indices = @transform_0, window_bounds = array<i64: 256, 96>}, {pipeline_mode = #tpu.pipeline_mode<synchronous>, transform_indices = @transform_1, window_bounds = array<i64: 1, 96>}, {pipeline_mode = #tpu.pipeline_mode<synchronous>, transform_indices = @transform_2, window_bounds = array<i64: 1, 96>}, {transform_indices = @transform_3, window_bounds = array<i64: 256, 96>}]} {
    %c0 = arith.constant 0 : index
    %c0_0 = arith.constant 0 : index
    %0 = vector.load %arg1[%c0, %c0_0] : memref<256x96xf32, #tpu.memory_space<vmem>>, vector<256x96xf32>
    %cst = arith.constant dense<0.000000e+00> : vector<256xf32>
    %1 = vector.multi_reduction <add>, %0, %cst [1] : vector<256x96xf32> to vector<256xf32>
    %2 = vector.shape_cast %1 : vector<256xf32> to vector<256x1xf32>
    %cst_1 = arith.constant 9.600000e+01 : f32
    %3 = vector.broadcast %cst_1 : f32 to vector<256x1xf32>
    %4 = arith.divf %2, %3 : vector<256x1xf32>
    %5 = vector.broadcast %4 : vector<256x1xf32> to vector<256x96xf32>
    %6 = arith.subf %0, %5 : vector<256x96xf32>
    %7 = arith.mulf %6, %6 : vector<256x96xf32>
    %cst_2 = arith.constant dense<0.000000e+00> : vector<256xf32>
    %8 = vector.multi_reduction <add>, %7, %cst_2 [1] : vector<256x96xf32> to vector<256xf32>
    %9 = vector.shape_cast %8 : vector<256xf32> to vector<256x1xf32>
    %cst_3 = arith.constant 9.600000e+01 : f32
    %10 = vector.broadcast %cst_3 : f32 to vector<256x1xf32>
    %11 = arith.divf %9, %10 : vector<256x1xf32>
    %cst_4 = arith.constant 9.99999974E-6 : f32
    %12 = vector.broadcast %cst_4 : f32 to vector<256x1xf32>
    %13 = arith.addf %11, %12 : vector<256x1xf32>
    %14 = math.rsqrt %13 : vector<256x1xf32>
    %15 = vector.broadcast %14 : vector<256x1xf32> to vector<256x96xf32>
    %16 = arith.mulf %6, %15 : vector<256x96xf32>
    %c0_5 = arith.constant 0 : index
    %c0_6 = arith.constant 0 : index
    %17 = vector.load %arg2[%c0_5, %c0_6] : memref<1x96xf32, #tpu.memory_space<vmem>>, vector<1x96xf32>
    %18 = vector.broadcast %17 : vector<1x96xf32> to vector<256x96xf32>
    %19 = arith.mulf %16, %18 : vector<256x96xf32>
    %c0_7 = arith.constant 0 : index
    %c0_8 = arith.constant 0 : index
    %20 = vector.load %arg3[%c0_7, %c0_8] : memref<1x96xf32, #tpu.memory_space<vmem>>, vector<1x96xf32>
    %21 = vector.broadcast %20 : vector<1x96xf32> to vector<256x96xf32>
    %22 = arith.addf %19, %21 : vector<256x96xf32>
    %c0_9 = arith.constant 0 : index
    %c0_10 = arith.constant 0 : index
    %23 = vector.load %arg4[%c0_9, %c0_10] : memref<256x96xf32, #tpu.memory_space<vmem>>, vector<256x96xf32>
    tpu.vector_store %arg4[%c0_9, %c0_10], %22 {strides = array<i32>} : memref<256x96xf32, #tpu.memory_space<vmem>>, vector<256x96xf32>,
    return
  }
  func.func @transform_0(%arg0: i32) -> (i32, i32) {
    %c0_i32 = arith.constant 0 : i32
    %c0_i32_0 = arith.constant 0 : i32
    return %arg0, %c0_i32 : i32, i32
  }
  func.func @transform_1(%arg0: i32) -> (i32, i32) {
    %c0_i32 = arith.constant 0 : i32
    %c0_i32_0 = arith.constant 0 : i32
    %c0_i32_1 = arith.constant 0 : i32
    return %c0_i32, %c0_i32_0 : i32, i32
  }
  func.func @transform_2(%arg0: i32) -> (i32, i32) {
    %c0_i32 = arith.constant 0 : i32
    %c0_i32_0 = arith.constant 0 : i32
    %c0_i32_1 = arith.constant 0 : i32
    return %c0_i32, %c0_i32_0 : i32, i32
  }
  func.func @transform_3(%arg0: i32) -> (i32, i32) {
    %c0_i32 = arith.constant 0 : i32
    %c0_i32_0 = arith.constant 0 : i32
    return %arg0, %c0_i32 : i32, i32
  }
}

</mosaic_0001>

<llo_original>
// kernel: patch_embed_impl.2
$region0: #{patch_embed_impl.2}
  #allocation0 [shape = 'u32[]', space=smem, size = 0x4, offset = 0x4, fixed_abs, tag = 'smem constant byte address 0x4 - core index']
  #allocation1 [shape = 'u32[144,128]{1,0:T(1,128)}', space=vmem, size = 0x12000, scoped, tag = 'internal scratch']
  %s0 = inlined_call_operand.vmem [shape: f32[3328,48], index: 0, kind: input, shape index: {}]
  %s1 = inlined_call_operand.vmem [shape: bf16[48,128], index: 1, kind: input, shape index: {}]
  %s2 = inlined_call_operand.vmem [shape: f32[1,128], index: 2, kind: input, shape index: {}]
  %s3 = inlined_call_operand.vmem [shape: f32[3328,128], index: 3, kind: output, shape index: {}]
  %s4 = sld [smem:[#allocation0]]
  $region45: #{patch_embed_impl.2} parent=0
    _
  %s6 = ssub.s32 1, %s4
  %s7 = scalar_select 0, %s6, %s4
  loop: start=0, step=1, limit=15
  $region2: #{patch_embed_impl.2} parent=0 // loop_pre_header
    _
  $region3: #{patch_embed_impl.2} parent=0 // loop_header
    %s9 = sphi 0, %s13
    %p10 = scmp.ge.s32.totalorder %s9, 15
    %s16 = sphi 0, %s28
    %s17 = sphi 0, %s24
    %s18 = sphi 0, %s16
    %s19 = sphi 0, %s17
    %s20 = sphi 0, %s18
    %s21 = sphi 0, %s19
    %s31 = sphi 0, %s33
    %s34 = sphi 0, %s31
    %s35 = sphi 0, %s34
    %s51 = sphi 0, %s35
    %s57 = sphi 0, %s59
    %s60 = sphi 0, %s57
    %s61 = sphi 0, %s60
    %s77 = sphi 0, %s61
    %s83 = sphi 0, %s85
    %s86 = sphi 0, %s83
    %s87 = sphi 0, %s86
    %s103 = sphi 0, %s87
    %s111 = sphi 0, %s113
    %s114 = sphi 0, %s111
    %s115 = sphi 0, %s114
    %s131 = sphi 0, %s115
  $region4: #{patch_embed_impl.2} parent=0 // loop_header_branch
    %12 = sbr.rel (%p10) target = $region8
  $region5: #{patch_embed_impl.2} parent=0 // loop_body
    %s14 = ssub.s32 %s9, 1
    %s15 = ssub.s32 %s9, 2
    %s22 = sadd.s32 1, %s17
    %p23 = scmp.ge.s32.totalorder %s22, 1
    %s24 = scalar_select %p23, 0, %s22
    %s25 = sadd.s32 1, %s16
    %s26 = scalar_select %p23, %s25, %s16
    %p27 = scmp.ge.s32.totalorder %s26, 13
    %s28 = scalar_select %p27, 0, %s26
    %s29 = ssub.s32 %s16, %s28
    %p30 = scmp.eq.s32.totalorder %s29, 0
    %s32 = sadd.s32 %s31, 1
    %s33 = scalar_select %p30, %s31, %s32
    %p36 = pneg %p30
    %p37 = scmp.eq.s32.totalorder %s9, 12
    %p38 = por %p36, %p37
    %p39 = scmp.ne.s32.totalorder %s31, %s34
    %p40 = scmp.eq.s32.totalorder %s9, 0
    %p41 = por %p39, %p40
    %p42 = scmp.ne.s32.totalorder %s31, %s34
    %p43 = scmp.eq.s32.totalorder %s14, 12
    %p44 = por %p42, %p43
    %p45 = scmp.ne.s32.totalorder %s34, %s35
    %p46 = scmp.eq.s32.totalorder %s14, 0
    %p47 = por %p45, %p46
    %p48 = scmp.ne.s32.totalorder %s34, %s35
    %p49 = scmp.eq.s32.totalorder %s15, 12
    %p50 = por %p48, %p49
    %p52 = scmp.ne.s32.totalorder %s35, %s51
    %p53 = scmp.eq.s32.totalorder %s15, 0
    %p54 = por %p52, %p53
    %s55 = ssub.s32 %s17, %s24
    %p56 = scmp.eq.s32.totalorder %s55, 0
    %s58 = sadd.s32 %s57, 1
    %s59 = scalar_select %p56, %s57, %s58
    %p62 = pneg %p56
    %p63 = scmp.eq.s32.totalorder %s9, 12
    %p64 = por %p62, %p63
    %p65 = scmp.ne.s32.totalorder %s57, %s60
    %p66 = scmp.eq.s32.totalorder %s9, 0
    %p67 = por %p65, %p66
    %p68 = scmp.ne.s32.totalorder %s57, %s60
    %p69 = scmp.eq.s32.totalorder %s14, 12
    %p70 = por %p68, %p69
    %p71 = scmp.ne.s32.totalorder %s60, %s61
    %p72 = scmp.eq.s32.totalorder %s14, 0
    %p73 = por %p71, %p72
    %p74 = scmp.ne.s32.totalorder %s60, %s61
    %p75 = scmp.eq.s32.totalorder %s15, 12
    %p76 = por %p74, %p75
    %p78 = scmp.ne.s32.totalorder %s61, %s77
    %p79 = scmp.eq.s32.totalorder %s15, 0
    %p80 = por %p78, %p79
    %s81 = ssub.s32 %s17, %s24
    %p82 = scmp.eq.s32.totalorder %s81, 0
    %s84 = sadd.s32 %s83, 1
    %s85 = scalar_select %p82, %s83, %s84
    %p88 = pneg %p82
    %p89 = scmp.eq.s32.totalorder %s9, 12
    %p90 = por %p88, %p89
    %p91 = scmp.ne.s32.totalorder %s83, %s86
    %p92 = scmp.eq.s32.totalorder %s9, 0
    %p93 = por %p91, %p92
    %p94 = scmp.ne.s32.totalorder %s83, %s86
    %p95 = scmp.eq.s32.totalorder %s14, 12
    %p96 = por %p94, %p95
    %p97 = scmp.ne.s32.totalorder %s86, %s87
    %p98 = scmp.eq.s32.totalorder %s14, 0
    %p99 = por %p97, %p98
    %p100 = scmp.ne.s32.totalorder %s86, %s87
    %p101 = scmp.eq.s32.totalorder %s15, 12
    %p102 = por %p100, %p101
    %p104 = scmp.ne.s32.totalorder %s87, %s103
    %p105 = scmp.eq.s32.totalorder %s15, 0
    %p106 = por %p104, %p105
    %s107 = ssub.s32 %s16, %s28
    %s108 = ssub.s32 %s17, %s24
    %s109 = sor.u32 %s107, %s108
    %p110 = scmp.eq.s32.totalorder %s109, 0
    %s112 = sadd.s32 %s111, 1
    %s113 = scalar_select %p110, %s111, %s112
    %p116 = pneg %p110
    %p117 = scmp.eq.s32.totalorder %s9, 12
    %p118 = por %p116, %p117
    %p119 = scmp.ne.s32.totalorder %s111, %s114
    %p120 = scmp.eq.s32.totalorder %s9, 0
    %p121 = por %p119, %p120
    %p122 = scmp.ne.s32.totalorder %s111, %s114
    %p123 = scmp.eq.s32.totalorder %s14, 12
    %p124 = por %p122, %p123
    %p125 = scmp.ne.s32.totalorder %s114, %s115
    %p126 = scmp.eq.s32.totalorder %s14, 0
    %p127 = por %p125, %p126
    %p128 = scmp.ne.s32.totalorder %s114, %s115
    %p129 = scmp.eq.s32.totalorder %s15, 12
    %p130 = por %p128, %p129
    %p132 = scmp.ne.s32.totalorder %s115, %s131
    %p133 = scmp.eq.s32.totalorder %s15, 0
    %p134 = por %p132, %p133
    %p135 = scmp.le.s32.totalorder 1, %s9
    %p136 = scmp.lt.s32.totalorder %s9, 14
    %p137 = pnand %p135, %p136
    %p138 = pneg %p137
    // Predicated region
    $region9: #{patch_embed_impl.2} parent=5 // pred_check
      _
    $region10: #{patch_embed_impl.2} parent=5 // pred_check_branch
      %140 = sbr.rel (%p137) target = $region12
    $region11: #{patch_embed_impl.2} parent=5 // pred_region
      %s141 = ssub.s32 %s9, 1
      // Predicated region
      $region13: #{patch_embed_impl.2} parent=11 // pred_check
        %p142 = pneg %p73
      $region14: #{patch_embed_impl.2} parent=11 // pred_check_branch
        %144 = sbr.rel (%p142) target = $region16
      $region15: #{patch_embed_impl.2} parent=11 // pred_region
        %p145 = scmp.lt.s32.totalorder %s19, 0
        %s146 = scalar_select %p145, %s19, 0
        %s147 = smul.addr %s146, 4
        %s148 = scalar_lea.vmem %s1, %s147
      $region16: #{patch_embed_impl.2} parent=11 // pred_fallthru
        _
      // Predicated region
      $region17: #{patch_embed_impl.2} parent=11 // pred_check
        %p149 = pneg %p99
      $region18: #{patch_embed_impl.2} parent=11 // pred_check_branch
        %151 = sbr.rel (%p149) target = $region20
      $region19: #{patch_embed_impl.2} parent=11 // pred_region
        %p152 = scmp.lt.s32.totalorder %s19, 0
        %s153 = scalar_select %p152, %s19, 0
        %s154 = scalar_lea.vmem %s2, %s153
      $region20: #{patch_embed_impl.2} parent=11 // pred_fallthru
        _
    $region12: #{patch_embed_impl.2} parent=5 // pred_fallthru
      _
    %p155 = scmp.lt.s32.totalorder %s9, 13
    // Predicated region
    $region21: #{patch_embed_impl.2} parent=5 // pred_check
      %p156 = pneg %p155
    $region22: #{patch_embed_impl.2} parent=5 // pred_check_branch
      %158 = sbr.rel (%p156) target = $region24
    $region23: #{patch_embed_impl.2} parent=5 // pred_region
      // Predicated region
      $region25: #{patch_embed_impl.2} parent=23 // pred_check
        %p159 = pneg %p41
      $region26: #{patch_embed_impl.2} parent=23 // pred_check_branch
        %161 = sbr.rel (%p159) target = $region28
      $region27: #{patch_embed_impl.2} parent=23 // pred_region
        %s162 = smul.u32 32, %s16
        %p163 = scmp.lt.s32.totalorder %s162, 415
        %s164 = scalar_select %p163, %s162, 415
        %s165 = smul.addr %s164, 8
        %s166 = scalar_lea.vmem %s0, %s165
        %s167 = smul.u32 32, %s16
      $region28: #{patch_embed_impl.2} parent=23 // pred_fallthru
        _
    $region24: #{patch_embed_impl.2} parent=5 // pred_fallthru
      _
    %p168 = scmp.le.s32.totalorder 1, %s9
    %p169 = scmp.lt.s32.totalorder %s9, 14
    %p170 = pnand %p168, %p169
    %p171 = pneg %p170
    // Predicated region
    $region29: #{patch_embed_impl.2} parent=5 // pred_check
      _
    $region30: #{patch_embed_impl.2} parent=5 // pred_check_branch
      %173 = sbr.rel (%p170) target = $region32
    $region31: #{patch_embed_impl.2} parent=5 // pred_region
      %s174 = ssub.s32 %s9, 1
      %s175 = smul.u32 32, %s18
      %p176 = scmp.lt.s32.totalorder %s175, 415
      %s177 = scalar_select %p176, %s175, 415
      %s178 = smul.addr %s177, 8
      %s179 = scalar_lea.vmem %s0, %s178
      %p180 = pneg %p47
      %p181 = pneg %p44
      %p182 = scmp.lt.s32.totalorder %s19, 0
      %s183 = scalar_select %p182, %s19, 0
      %s184 = smul.addr %s183, 4
      %s185 = scalar_lea.vmem %s1, %s184
      %p186 = pneg %p73
      %p187 = pneg %p70
      %p188 = scmp.lt.s32.totalorder %s19, 0
      %s189 = scalar_select %p188, %s19, 0
      %s190 = scalar_lea.vmem %s2, %s189
      %p191 = pneg %p99
      %p192 = pneg %p96
      %p193 = pneg %p127
      %p194 = pneg %p124
      %s195 = smul.u32 32, %s18
      %p196 = scmp.lt.s32.totalorder %s195, 415
      %s197 = scalar_select %p196, %s195, 415
      %p198 = scmp.lt.s32.totalorder %s19, 0
      %s199 = scalar_select %p198, %s19, 0
      %s200 = sadd.s32 %s199, %s197
      %s201 = smul.addr %s200, 8
      %s202 = scalar_lea.vmem %s3, %s201
      %s203 = smul.u32 32, %s18
      %p204 = scmp.lt.s32.totalorder %s203, 415
      %s205 = scalar_select %p204, %s203, 415
      %s206 = smul.addr %s205, 8
      %s207 = scalar_lea.vmem %s0, %s206
      %s208 = smul.u32 32, %s18
      %p209 = scmp.lt.s32.totalorder %s19, 0
      %s210 = scalar_select %p209, %s19, 0
      %s211 = smul.addr %s210, 4
      %s212 = scalar_lea.vmem %s1, %s211
      %p213 = scmp.lt.s32.totalorder %s19, 0
      %s214 = scalar_select %p213, %s19, 0
      %s215 = scalar_lea.vmem %s2, %s214
      %s216 = smul.u32 32, %s18
      %p217 = scmp.lt.s32.totalorder %s216, 415
      %s218 = scalar_select %p217, %s216, 415
      %p219 = scmp.lt.s32.totalorder %s19, 0
      %s220 = scalar_select %p219, %s19, 0
      %s221 = sadd.s32 %s220, %s218
      %s222 = smul.addr %s221, 8
      %s223 = scalar_lea.vmem %s3, %s222
      %s224 = smul.u32 32, %s18
      %v226 = vld [vmem:[%s207] sm:$0xff]
      %v227 = vld [vmem:[%s207 + $0x8] sm:$0xff]
      %v228 = vld [vmem:[%s207 + $0x10] sm:$0xff]
      %v229 = vld [vmem:[%s207 + $0x18] sm:$0xff]
      %v230 = vld [vmem:[%s207 + $0x20] sm:$0xff]
      %v231 = vld [vmem:[%s207 + $0x28] sm:$0xff]
      %v232 = vld [vmem:[%s207 + $0x30] sm:$0xff]
      %v233 = vld [vmem:[%s207 + $0x38] sm:$0xff]
      %v234 = vld [vmem:[%s207 + $0x40] sm:$0xff]
      %v235 = vld [vmem:[%s207 + $0x48] sm:$0xff]
      %v236 = vld [vmem:[%s207 + $0x50] sm:$0xff]
      %v237 = vld [vmem:[%s207 + $0x58] sm:$0xff]
      %v238 = vld [vmem:[%s207 + $0x60] sm:$0xff]
      %v239 = vld [vmem:[%s207 + $0x68] sm:$0xff]
      %v240 = vld [vmem:[%s207 + $0x70] sm:$0xff]
      %v241 = vld [vmem:[%s207 + $0x78] sm:$0xff]
      %v242 = vld [vmem:[%s207 + $0x80] sm:$0xff]
      %v243 = vld [vmem:[%s207 + $0x88] sm:$0xff]
      %v244 = vld [vmem:[%s207 + $0x90] sm:$0xff]
      %v245 = vld [vmem:[%s207 + $0x98] sm:$0xff]
      %v246 = vld [vmem:[%s207 + $0xa0] sm:$0xff]
      %v247 = vld [vmem:[%s207 + $0xa8] sm:$0xff]
      %v248 = vld [vmem:[%s207 + $0xb0] sm:$0xff]
      %v249 = vld [vmem:[%s207 + $0xb8] sm:$0xff]
      %v250 = vld [vmem:[%s207 + $0xc0] sm:$0xff]
      %v251 = vld [vmem:[%s207 + $0xc8] sm:$0xff]
      %v252 = vld [vmem:[%s207 + $0xd0] sm:$0xff]
      %v253 = vld [vmem:[%s207 + $0xd8] sm:$0xff]
      %v254 = vld [vmem:[%s207 + $0xe0] sm:$0xff]
      %v255 = vld [vmem:[%s207 + $0xe8] sm:$0xff]
      %v256 = vld [vmem:[%s207 + $0xf0] sm:$0xff]
      %v257 = vld [vmem:[%s207 + $0xf8] sm:$0xff]
      %v258 = vpack.c.bf16 %v227, %v226
      %v259 = vpack.c.bf16 %v229, %v228
      %v260 = vpack.c.bf16 %v231, %v230
      %v261 = vpack.c.bf16 %v233, %v232
      %v262 = vpack.c.bf16 %v235, %v234
      %v263 = vpack.c.bf16 %v237, %v236
      %v264 = vpack.c.bf16 %v239, %v238
      %v265 = vpack.c.bf16 %v241, %v240
      %v266 = vpack.c.bf16 %v243, %v242
      %v267 = vpack.c.bf16 %v245, %v244
      %v268 = vpack.c.bf16 %v247, %v246
      %v269 = vpack.c.bf16 %v249, %v248
      %v270 = vpack.c.bf16 %v251, %v250
      %v271 = vpack.c.bf16 %v253, %v252
      %v272 = vpack.c.bf16 %v255, %v254
      %v273 = vpack.c.bf16 %v257, %v256
      %v274 = vld [vmem:[%s212] sm:$0xf]
      %v275 = vld [vmem:[%s212 + $0x4] sm:$0xf]
      %v276 = vld [vmem:[%s212 + $0x8] sm:$0xf]
      %v277 = vld [vmem:[%s212 + $0xc] sm:$0xf]
      %v278 = vld [vmem:[%s212 + $0x10] sm:$0xf]
      %v279 = vld [vmem:[%s212 + $0x14] sm:$0xf]
      %v280 = vld [vmem:[%s215] sm:$0x1]
      %v282 = vlaneseq
      %v283 = vshrl.u32 %v282, 7
      %v284 = vsub.s32 0, %v283
      %v285 = vrot.slane %v280, %v284
      %v293 = vunpack.c.l.b16 %v274
      %v294 = vunpack.c.l.b16 %v275
      %v295 = vunpack.c.l.b16 %v276
      %v296 = vunpack.c.l.b16 %v277
      %v297 = vunpack.c.l.b16 %v278
      %v298 = vunpack.c.l.b16 %v279
      %v299 = vpack.c.b16 %v294, %v293
      %v300 = vpack.c.b16 %v296, %v295
      %v301 = vpack.c.b16 %v298, %v297
      %vm305 = vcmask 392192
      %v307 = vsel %vm305, %v258, 0
      %v310 = vsel %vm305, %v259, 0
      %v313 = vsel %vm305, %v260, 0
      %v316 = vsel %vm305, %v261, 0
      %v319 = vsel %vm305, %v262, 0
      %v322 = vsel %vm305, %v263, 0
      %v325 = vsel %vm305, %v264, 0
      %v328 = vsel %vm305, %v265, 0
      %v331 = vsel %vm305, %v266, 0
      %v334 = vsel %vm305, %v267, 0
      %v337 = vsel %vm305, %v268, 0
      %v340 = vsel %vm305, %v269, 0
      %v343 = vsel %vm305, %v270, 0
      %v346 = vsel %vm305, %v271, 0
      %v349 = vsel %vm305, %v272, 0
      %v352 = vsel %vm305, %v273, 0
      %354 = vmatprep.subr.bf16.mxu0 0
      %355 = vmatpush1.bf16.msra.mxu0 %v299
      %356 = vmatprep.subr.bf16.mxu0 0
      %357 = vmatpush1.bf16.msra.mxu0 %v300
      %358 = vmatprep.subr.bf16.mxu0 0
      %359 = vmatpush1.bf16.msra.mxu0 %v301
      %360 = vmatprep.subr.bf16.mxu0 0
      %361 = vmatpush1.bf16.msra.mxu0 0
      %362 = vmatprep.subr.bf16.mxu0 0
      %363 = vmatpush1.bf16.msra.mxu0 0
      %364 = vmatprep.subr.bf16.mxu0 0
      %365 = vmatpush1.bf16.msra.mxu0 0
      %366 = vmatprep.subr.bf16.mxu0 0
      %367 = vmatpush1.bf16.msra.mxu0 0
      %368 = vmatprep.subr.bf16.mxu0 0
      %369 = vmatpush1.bf16.msra.mxu0 0
      %370 = vmatprep.subr.bf16.mxu0 0
      %371 = vmatpush1.bf16.msra.mxu0 0
      %372 = vmatprep.subr.bf16.mxu0 0
      %373 = vmatpush1.bf16.msra.mxu0 0
      %374 = vmatprep.subr.bf16.mxu0 0
      %375 = vmatpush1.bf16.msra.mxu0 0
      %376 = vmatprep.subr.bf16.mxu0 0
      %377 = vmatpush1.bf16.msra.mxu0 0
      %378 = vmatprep.subr.bf16.mxu0 0
      %379 = vmatpush1.bf16.msra.mxu0 0
      %380 = vmatprep.subr.bf16.mxu0 0
      %381 = vmatpush1.bf16.msra.mxu0 0
      %382 = vmatprep.subr.bf16.mxu0 0
      %383 = vmatpush1.bf16.msra.mxu0 0
      %384 = vmatprep.subr.bf16.mxu0 0
      %385 = vmatpush1.bf16.msra.mxu0 0
      %386 = vmatprep.mubr.bf16.mxu0 0
      %387 = vmatmul.mubr.bf16.gmra.mrb[0].mxu0 %v307
      %v388 = vpop.f32.mrb[0].mxu0
      %v389 = vadd.f32 %v285, %v388
      %v390 = vpop.f32.mrb[0].mxu0
      %v391 = vpop.f32.mrb[0].mxu0
      %v392 = vadd.f32 %v285, %v391
      %v393 = vpop.f32.mrb[0].mxu0
      %394 = vmatprep.mubr.bf16.mxu0 0
      %395 = vmatmul.mubr.bf16.gmra.mrb[0].mxu0 %v310
      %v396 = vpop.f32.mrb[0].mxu0
      %v397 = vadd.f32 %v285, %v396
      %v398 = vpop.f32.mrb[0].mxu0
      %v399 = vpop.f32.mrb[0].mxu0
      %v400 = vadd.f32 %v285, %v399
      %v401 = vpop.f32.mrb[0].mxu0
      %402 = vmatprep.mubr.bf16.mxu0 0
      %403 = vmatmul.mubr.bf16.gmra.mrb[0].mxu0 %v313
      %v404 = vpop.f32.mrb[0].mxu0
      %v405 = vadd.f32 %v285, %v404
      %v406 = vpop.f32.mrb[0].mxu0
      %v407 = vpop.f32.mrb[0].mxu0
      %v408 = vadd.f32 %v285, %v407
      %v409 = vpop.f32.mrb[0].mxu0
      %410 = vmatprep.mubr.bf16.mxu0 0
      %411 = vmatmul.mubr.bf16.gmra.mrb[0].mxu0 %v316
      %v412 = vpop.f32.mrb[0].mxu0
      %v413 = vadd.f32 %v285, %v412
      %v414 = vpop.f32.mrb[0].mxu0
      %v415 = vpop.f32.mrb[0].mxu0
      %v416 = vadd.f32 %v285, %v415
      %v417 = vpop.f32.mrb[0].mxu0
      %418 = vmatprep.mubr.bf16.mxu0 0
      %419 = vmatmul.mubr.bf16.gmra.mrb[0].mxu0 %v319
      %v420 = vpop.f32.mrb[0].mxu0
      %v421 = vadd.f32 %v285, %v420
      %v422 = vpop.f32.mrb[0].mxu0
      %v423 = vpop.f32.mrb[0].mxu0
      %v424 = vadd.f32 %v285, %v423
      %v425 = vpop.f32.mrb[0].mxu0
      %426 = vmatprep.mubr.bf16.mxu0 0
      %427 = vmatmul.mubr.bf16.gmra.mrb[0].mxu0 %v322
      %v428 = vpop.f32.mrb[0].mxu0
      %v429 = vadd.f32 %v285, %v428
      %v430 = vpop.f32.mrb[0].mxu0
      %v431 = vpop.f32.mrb[0].mxu0
      %v432 = vadd.f32 %v285, %v431
      %v433 = vpop.f32.mrb[0].mxu0
      %434 = vmatprep.mubr.bf16.mxu0 0
      %435 = vmatmul.mubr.bf16.gmra.mrb[0].mxu0 %v325
      %v436 = vpop.f32.mrb[0].mxu0
      %v437 = vadd.f32 %v285, %v436
      %v438 = vpop.f32.mrb[0].mxu0
      %v439 = vpop.f32.mrb[0].mxu0
      %v440 = vadd.f32 %v285, %v439
      %v441 = vpop.f32.mrb[0].mxu0
      %442 = vmatprep.mubr.bf16.mxu0 0
      %443 = vmatmul.mubr.bf16.gmra.mrb[0].mxu0 %v328
      %v444 = vpop.f32.mrb[0].mxu0
      %v445 = vadd.f32 %v285, %v444
      %v446 = vpop.f32.mrb[0].mxu0
      %v447 = vpop.f32.mrb[0].mxu0
      %v448 = vadd.f32 %v285, %v447
      %v449 = vpop.f32.mrb[0].mxu0
      %450 = vmatprep.mubr.bf16.mxu0 0
      %451 = vmatmul.mubr.bf16.gmra.mrb[0].mxu0 %v331
      %v452 = vpop.f32.mrb[0].mxu0
      %v453 = vadd.f32 %v285, %v452
      %v454 = vpop.f32.mrb[0].mxu0
      %v455 = vpop.f32.mrb[0].mxu0
      %v456 = vadd.f32 %v285, %v455
      %v457 = vpop.f32.mrb[0].mxu0
      %458 = vmatprep.mubr.bf16.mxu0 0
      %459 = vmatmul.mubr.bf16.gmra.mrb[0].mxu0 %v334
      %v460 = vpop.f32.mrb[0].mxu0
      %v461 = vadd.f32 %v285, %v460
      %v462 = vpop.f32.mrb[0].mxu0
      %v463 = vpop.f32.mrb[0].mxu0
      %v464 = vadd.f32 %v285, %v463
      %v465 = vpop.f32.mrb[0].mxu0
      %466 = vmatprep.mubr.bf16.mxu0 0
      %467 = vmatmul.mubr.bf16.gmra.mrb[0].mxu0 %v337
      %v468 = vpop.f32.mrb[0].mxu0
      %v469 = vadd.f32 %v285, %v468
      %v470 = vpop.f32.mrb[0].mxu0
      %v471 = vpop.f32.mrb[0].mxu0
      %v472 = vadd.f32 %v285, %v471
      %v473 = vpop.f32.mrb[0].mxu0
      %474 = vmatprep.mubr.bf16.mxu0 0
      %475 = vmatmul.mubr.bf16.gmra.mrb[0].mxu0 %v340
      %v476 = vpop.f32.mrb[0].mxu0
      %v477 = vadd.f32 %v285, %v476
      %v478 = vpop.f32.mrb[0].mxu0
      %v479 = vpop.f32.mrb[0].mxu0
      %v480 = vadd.f32 %v285, %v479
      %v481 = vpop.f32.mrb[0].mxu0
      %482 = vmatprep.mubr.bf16.mxu0 0
      %483 = vmatmul.mubr.bf16.gmra.mrb[0].mxu0 %v343
      %v484 = vpop.f32.mrb[0].mxu0
      %v485 = vadd.f32 %v285, %v484
      %v486 = vpop.f32.mrb[0].mxu0
      %v487 = vpop.f32.mrb[0].mxu0
      %v488 = vadd.f32 %v285, %v487
      %v489 = vpop.f32.mrb[0].mxu0
      %490 = vmatprep.mubr.bf16.mxu0 0
      %491 = vmatmul.mubr.bf16.gmra.mrb[0].mxu0 %v346
      %v492 = vpop.f32.mrb[0].mxu0
      %v493 = vadd.f32 %v285, %v492
      %v494 = vpop.f32.mrb[0].mxu0
      %v495 = vpop.f32.mrb[0].mxu0
      %v496 = vadd.f32 %v285, %v495
      %v497 = vpop.f32.mrb[0].mxu0
      %498 = vmatprep.mubr.bf16.mxu0 0
      %499 = vmatmul.mubr.bf16.gmra.mrb[0].mxu0 %v349
      %v500 = vpop.f32.mrb[0].mxu0
      %v501 = vadd.f32 %v285, %v500
      %v502 = vpop.f32.mrb[0].mxu0
      %v503 = vpop.f32.mrb[0].mxu0
      %v504 = vadd.f32 %v285, %v503
      %v505 = vpop.f32.mrb[0].mxu0
      %506 = vmatprep.mubr.bf16.mxu0 0
      %507 = vmatmul.mubr.bf16.gmra.mrb[0].mxu0 %v352
      %v508 = vpop.f32.mrb[0].mxu0
      %v509 = vadd.f32 %v285, %v508
      %v510 = vpop.f32.mrb[0].mxu0
      %v511 = vpop.f32.mrb[0].mxu0
      %v512 = vadd.f32 %v285, %v511
      %v513 = vpop.f32.mrb[0].mxu0
      %514 = vdwg.mxu0
      %515 = vst [vmem:[%s223] sm:$0xff] %v389
      %516 = vst [vmem:[%s223 + $0x8] sm:$0xff] %v392
      %517 = vst [vmem:[%s223 + $0x10] sm:$0xff] %v397
      %518 = vst [vmem:[%s223 + $0x18] sm:$0xff] %v400
      %519 = vst [vmem:[%s223 + $0x20] sm:$0xff] %v405
      %520 = vst [vmem:[%s223 + $0x28] sm:$0xff] %v408
      %521 = vst [vmem:[%s223 + $0x30] sm:$0xff] %v413
      %522 = vst [vmem:[%s223 + $0x38] sm:$0xff] %v416
      %523 = vst [vmem:[%s223 + $0x40] sm:$0xff] %v421
      %524 = vst [vmem:[%s223 + $0x48] sm:$0xff] %v424
      %525 = vst [vmem:[%s223 + $0x50] sm:$0xff] %v429
      %526 = vst [vmem:[%s223 + $0x58] sm:$0xff] %v432
      %527 = vst [vmem:[%s223 + $0x60] sm:$0xff] %v437
      %528 = vst [vmem:[%s223 + $0x68] sm:$0xff] %v440
      %529 = vst [vmem:[%s223 + $0x70] sm:$0xff] %v445
      %530 = vst [vmem:[%s223 + $0x78] sm:$0xff] %v448
      %531 = vst [vmem:[%s223 + $0x80] sm:$0xff] %v453
      %532 = vst [vmem:[%s223 + $0x88] sm:$0xff] %v456
      %533 = vst [vmem:[%s223 + $0x90] sm:$0xff] %v461
      %534 = vst [vmem:[%s223 + $0x98] sm:$0xff] %v464
      %535 = vst [vmem:[%s223 + $0xa0] sm:$0xff] %v469
      %536 = vst [vmem:[%s223 + $0xa8] sm:$0xff] %v472
      %537 = vst [vmem:[%s223 + $0xb0] sm:$0xff] %v477
      %538 = vst [vmem:[%s223 + $0xb8] sm:$0xff] %v480
      %539 = vst [vmem:[%s223 + $0xc0] sm:$0xff] %v485
      %540 = vst [vmem:[%s223 + $0xc8] sm:$0xff] %v488
      %541 = vst [vmem:[%s223 + $0xd0] sm:$0xff] %v493
      %542 = vst [vmem:[%s223 + $0xd8] sm:$0xff] %v496
      %543 = vst [vmem:[%s223 + $0xe0] sm:$0xff] %v501
      %544 = vst [vmem:[%s223 + $0xe8] sm:$0xff] %v504
      %545 = vst [vmem:[%s223 + $0xf0] sm:$0xff] %v509
      %546 = vst [vmem:[%s223 + $0xf8] sm:$0xff] %v512
      %s547 = smul.u32 32, %s18
      %p548 = scmp.lt.s32.totalorder %s547, 415
      %s549 = scalar_select %p548, %s547, 415
      %p550 = scmp.lt.s32.totalorder %s19, 0
      %s551 = scalar_select %p550, %s19, 0
      %s552 = sadd.s32 %s551, %s549
      %s553 = smul.addr %s552, 8
      %s554 = scalar_lea.vmem %s3, %s553
      // Predicated region
      $region33: #{patch_embed_impl.2} parent=31 // pred_check
        %p555 = pneg %p124
      $region34: #{patch_embed_impl.2} parent=31 // pred_check_branch
        %557 = sbr.rel (%p555) target = $region36
      $region35: #{patch_embed_impl.2} parent=31 // pred_region
        %s558 = smul.u32 32, %s18
      $region36: #{patch_embed_impl.2} parent=31 // pred_fallthru
        _
    $region32: #{patch_embed_impl.2} parent=5 // pred_fallthru
      _
    %p559 = scmp.le.s32.totalorder 2, %s9
    // Predicated region
    $region37: #{patch_embed_impl.2} parent=5 // pred_check
      %p560 = pneg %p559
    $region38: #{patch_embed_impl.2} parent=5 // pred_check_branch
      %562 = sbr.rel (%p560) target = $region40
    $region39: #{patch_embed_impl.2} parent=5 // pred_region
      %s563 = ssub.s32 %s9, 2
      // Predicated region
      $region41: #{patch_embed_impl.2} parent=39 // pred_check
        %p564 = pneg %p130
      $region42: #{patch_embed_impl.2} parent=39 // pred_check_branch
        %566 = sbr.rel (%p564) target = $region44
      $region43: #{patch_embed_impl.2} parent=39 // pred_region
        %s567 = smul.u32 32, %s20
        %p568 = scmp.lt.s32.totalorder %s567, 415
        %s569 = scalar_select %p568, %s567, 415
        %p570 = scmp.lt.s32.totalorder %s21, 0
        %s571 = scalar_select %p570, %s21, 0
        %s572 = sadd.s32 %s571, %s569
        %s573 = smul.addr %s572, 8
        %s574 = scalar_lea.vmem %s3, %s573
      $region44: #{patch_embed_impl.2} parent=39 // pred_fallthru
        _
    $region40: #{patch_embed_impl.2} parent=5 // pred_fallthru
      _
  $region6: #{patch_embed_impl.2} parent=0 // loop_footer
    %s13 = sadd.s32 1, %s9
  $region7: #{patch_embed_impl.2} parent=0 // loop_footer_branch
    %8 = sbr.rel target = $region3
  $region8: #{patch_embed_impl.2} parent=0 // loop_exit
    _

// kernel: patch_embed_impl.3
$region0: #{patch_embed_impl.3}
  #allocation0 [shape = 'u32[]', space=smem, size = 0x4, offset = 0x4, fixed_abs, tag = 'smem constant byte address 0x4 - core index']
  #allocation1 [shape = 'u32[144,128]{1,0:T(1,128)}', space=vmem, size = 0x12000, scoped, tag = 'internal scratch']
  %s0 = inlined_call_operand.vmem [shape: f32[3328,96], index: 0, kind: input, shape index: {}]
  %s1 = inlined_call_operand.vmem [shape: f32[1,96], index: 1, kind: input, shape index: {}]
  %s2 = inlined_call_operand.vmem [shape: f32[1,96], index: 2, kind: input, shape index: {}]
  %s3 = inlined_call_operand.vmem [shape: f32[3328,96], index: 3, kind: output, shape index: {}]
  %s4 = sld [smem:[#allocation0]]
  $region45: #{patch_embed_impl.3} parent=0
    _
  %s6 = ssub.s32 1, %s4
  %s7 = scalar_select 0, %s6, %s4
  loop: start=0, step=1, limit=15
  $region2: #{patch_embed_impl.3} parent=0 // loop_pre_header
    _
  $region3: #{patch_embed_impl.3} parent=0 // loop_header
    %s9 = sphi 0, %s13
    %p10 = scmp.ge.s32.totalorder %s9, 15
    %s19 = sphi 0, %s21
    %s22 = sphi 0, %s19
    %s23 = sphi 0, %s22
    %s39 = sphi 0, %s23
    %s43 = sphi 0, %s43
    %s45 = sphi 0, %s43
    %s46 = sphi 0, %s45
    %s60 = sphi 0, %s46
    %s64 = sphi 0, %s64
    %s66 = sphi 0, %s64
    %s67 = sphi 0, %s66
    %s81 = sphi 0, %s67
    %s87 = sphi 0, %s89
    %s90 = sphi 0, %s87
    %s91 = sphi 0, %s90
    %s107 = sphi 0, %s91
  $region4: #{patch_embed_impl.3} parent=0 // loop_header_branch
    %12 = sbr.rel (%p10) target = $region8
  $region5: #{patch_embed_impl.3} parent=0 // loop_body
    %s14 = ssub.s32 %s9, 1
    %s15 = ssub.s32 %s9, 2
    %s16 = sadd.s32 %s9, 1
    %s17 = ssub.s32 %s9, %s16
    %p18 = scmp.eq.s32.totalorder %s17, 0
    %s20 = sadd.s32 %s19, 1
    %s21 = scalar_select %p18, %s19, %s20
    %p24 = pneg %p18
    %p25 = scmp.eq.s32.totalorder %s9, 12
    %p26 = por %p24, %p25
    %p27 = scmp.ne.s32.totalorder %s19, %s22
    %p28 = scmp.eq.s32.totalorder %s9, 0
    %p29 = por %p27, %p28
    %p30 = scmp.ne.s32.totalorder %s19, %s22
    %p31 = scmp.eq.s32.totalorder %s14, 12
    %p32 = por %p30, %p31
    %p33 = scmp.ne.s32.totalorder %s22, %s23
    %p34 = scmp.eq.s32.totalorder %s14, 0
    %p35 = por %p33, %p34
    %p36 = scmp.ne.s32.totalorder %s22, %s23
    %p37 = scmp.eq.s32.totalorder %s15, 12
    %p38 = por %p36, %p37
    %p40 = scmp.ne.s32.totalorder %s23, %s39
    %p41 = scmp.eq.s32.totalorder %s15, 0
    %p42 = por %p40, %p41
    %s44 = sadd.s32 %s43, 1
    %p47 = scmp.eq.s32.totalorder %s9, 12
    %p48 = scmp.ne.s32.totalorder %s43, %s45
    %p49 = scmp.eq.s32.totalorder %s9, 0
    %p50 = por %p48, %p49
    %p51 = scmp.ne.s32.totalorder %s43, %s45
    %p52 = scmp.eq.s32.totalorder %s14, 12
    %p53 = por %p51, %p52
    %p54 = scmp.ne.s32.totalorder %s45, %s46
    %p55 = scmp.eq.s32.totalorder %s14, 0
    %p56 = por %p54, %p55
    %p57 = scmp.ne.s32.totalorder %s45, %s46
    %p58 = scmp.eq.s32.totalorder %s15, 12
    %p59 = por %p57, %p58
    %p61 = scmp.ne.s32.totalorder %s46, %s60
    %p62 = scmp.eq.s32.totalorder %s15, 0
    %p63 = por %p61, %p62
    %s65 = sadd.s32 %s64, 1
    %p68 = scmp.eq.s32.totalorder %s9, 12
    %p69 = scmp.ne.s32.totalorder %s64, %s66
    %p70 = scmp.eq.s32.totalorder %s9, 0
    %p71 = por %p69, %p70
    %p72 = scmp.ne.s32.totalorder %s64, %s66
    %p73 = scmp.eq.s32.totalorder %s14, 12
    %p74 = por %p72, %p73
    %p75 = scmp.ne.s32.totalorder %s66, %s67
    %p76 = scmp.eq.s32.totalorder %s14, 0
    %p77 = por %p75, %p76
    %p78 = scmp.ne.s32.totalorder %s66, %s67
    %p79 = scmp.eq.s32.totalorder %s15, 12
    %p80 = por %p78, %p79
    %p82 = scmp.ne.s32.totalorder %s67, %s81
    %p83 = scmp.eq.s32.totalorder %s15, 0
    %p84 = por %p82, %p83
    %s85 = ssub.s32 %s9, %s16
    %p86 = scmp.eq.s32.totalorder %s85, 0
    %s88 = sadd.s32 %s87, 1
    %s89 = scalar_select %p86, %s87, %s88
    %p92 = pneg %p86
    %p93 = scmp.eq.s32.totalorder %s9, 12
    %p94 = por %p92, %p93
    %p95 = scmp.ne.s32.totalorder %s87, %s90
    %p96 = scmp.eq.s32.totalorder %s9, 0
    %p97 = por %p95, %p96
    %p98 = scmp.ne.s32.totalorder %s87, %s90
    %p99 = scmp.eq.s32.totalorder %s14, 12
    %p100 = por %p98, %p99
    %p101 = scmp.ne.s32.totalorder %s90, %s91
    %p102 = scmp.eq.s32.totalorder %s14, 0
    %p103 = por %p101, %p102
    %p104 = scmp.ne.s32.totalorder %s90, %s91
    %p105 = scmp.eq.s32.totalorder %s15, 12
    %p106 = por %p104, %p105
    %p108 = scmp.ne.s32.totalorder %s91, %s107
    %p109 = scmp.eq.s32.totalorder %s15, 0
    %p110 = por %p108, %p109
    %p111 = scmp.le.s32.totalorder 1, %s9
    %p112 = scmp.lt.s32.totalorder %s9, 14
    %p113 = pnand %p111, %p112
    %p114 = pneg %p113
    // Predicated region
    $region9: #{patch_embed_impl.3} parent=5 // pred_check
      _
    $region10: #{patch_embed_impl.3} parent=5 // pred_check_branch
      %116 = sbr.rel (%p113) target = $region12
    $region11: #{patch_embed_impl.3} parent=5 // pred_region
      %s117 = ssub.s32 %s9, 1
      // Predicated region
      $region13: #{patch_embed_impl.3} parent=11 // pred_check
        %p118 = pneg %p56
      $region14: #{patch_embed_impl.3} parent=11 // pred_check_branch
        %120 = sbr.rel (%p118) target = $region16
      $region15: #{patch_embed_impl.3} parent=11 // pred_region
        _
      $region16: #{patch_embed_impl.3} parent=11 // pred_fallthru
        _
      // Predicated region
      $region17: #{patch_embed_impl.3} parent=11 // pred_check
        %p121 = pneg %p77
      $region18: #{patch_embed_impl.3} parent=11 // pred_check_branch
        %123 = sbr.rel (%p121) target = $region20
      $region19: #{patch_embed_impl.3} parent=11 // pred_region
        _
      $region20: #{patch_embed_impl.3} parent=11 // pred_fallthru
        _
    $region12: #{patch_embed_impl.3} parent=5 // pred_fallthru
      _
    %p124 = scmp.lt.s32.totalorder %s9, 13
    // Predicated region
    $region21: #{patch_embed_impl.3} parent=5 // pred_check
      %p125 = pneg %p124
    $region22: #{patch_embed_impl.3} parent=5 // pred_check_branch
      %127 = sbr.rel (%p125) target = $region24
    $region23: #{patch_embed_impl.3} parent=5 // pred_region
      // Predicated region
      $region25: #{patch_embed_impl.3} parent=23 // pred_check
        %p128 = pneg %p29
      $region26: #{patch_embed_impl.3} parent=23 // pred_check_branch
        %130 = sbr.rel (%p128) target = $region28
      $region27: #{patch_embed_impl.3} parent=23 // pred_region
        %s131 = smul.u32 32, %s9
        %p132 = scmp.lt.s32.totalorder %s131, 415
        %s133 = scalar_select %p132, %s131, 415
        %s134 = smul.addr %s133, 8
        %s135 = scalar_lea.vmem %s0, %s134
        %s136 = smul.u32 32, %s9
      $region28: #{patch_embed_impl.3} parent=23 // pred_fallthru
        _
    $region24: #{patch_embed_impl.3} parent=5 // pred_fallthru
      _
    %p137 = scmp.le.s32.totalorder 1, %s9
    %p138 = scmp.lt.s32.totalorder %s9, 14
    %p139 = pnand %p137, %p138
    %p140 = pneg %p139
    // Predicated region
    $region29: #{patch_embed_impl.3} parent=5 // pred_check
      _
    $region30: #{patch_embed_impl.3} parent=5 // pred_check_branch
      %142 = sbr.rel (%p139) target = $region32
    $region31: #{patch_embed_impl.3} parent=5 // pred_region
      %s143 = ssub.s32 %s9, 1
      %s144 = smul.u32 32, %s14
      %p145 = scmp.lt.s32.totalorder %s144, 415
      %s146 = scalar_select %p145, %s144, 415
      %s147 = smul.addr %s146, 8
      %s148 = scalar_lea.vmem %s0, %s147
      %p149 = pneg %p35
      %p150 = pneg %p32
      %p151 = pneg %p56
      %p152 = pneg %p53
      %p153 = pneg %p77
      %p154 = pneg %p74
      %p155 = pneg %p103
      %p156 = pneg %p100
      %s157 = smul.u32 32, %s14
      %p158 = scmp.lt.s32.totalorder %s157, 415
      %s159 = scalar_select %p158, %s157, 415
      %s160 = smul.addr %s159, 8
      %s161 = scalar_lea.vmem %s3, %s160
      %s162 = smul.u32 32, %s14
      %p163 = scmp.lt.s32.totalorder %s162, 415
      %s164 = scalar_select %p163, %s162, 415
      %s165 = smul.addr %s164, 8
      %s166 = scalar_lea.vmem %s0, %s165
      %s167 = smul.u32 32, %s14
      %s168 = smul.u32 32, %s14
      %p169 = scmp.lt.s32.totalorder %s168, 415
      %s170 = scalar_select %p169, %s168, 415
      %s171 = smul.addr %s170, 8
      %s172 = scalar_lea.vmem %s3, %s171
      %s173 = smul.u32 32, %s14
      %v174 = vld [vmem:[%s166] sm:$0xff]
      %v175 = vld [vmem:[%s166 + $0x8] sm:$0xff]
      %v176 = vld [vmem:[%s166 + $0x10] sm:$0xff]
      %v177 = vld [vmem:[%s166 + $0x18] sm:$0xff]
      %v178 = vld [vmem:[%s166 + $0x20] sm:$0xff]
      %v179 = vld [vmem:[%s166 + $0x28] sm:$0xff]
      %v180 = vld [vmem:[%s166 + $0x30] sm:$0xff]
      %v181 = vld [vmem:[%s166 + $0x38] sm:$0xff]
      %v182 = vld [vmem:[%s166 + $0x40] sm:$0xff]
      %v183 = vld [vmem:[%s166 + $0x48] sm:$0xff]
      %v184 = vld [vmem:[%s166 + $0x50] sm:$0xff]
      %v185 = vld [vmem:[%s166 + $0x58] sm:$0xff]
      %v186 = vld [vmem:[%s166 + $0x60] sm:$0xff]
      %v187 = vld [vmem:[%s166 + $0x68] sm:$0xff]
      %v188 = vld [vmem:[%s166 + $0x70] sm:$0xff]
      %v189 = vld [vmem:[%s166 + $0x78] sm:$0xff]
      %v190 = vld [vmem:[%s166 + $0x80] sm:$0xff]
      %v191 = vld [vmem:[%s166 + $0x88] sm:$0xff]
      %v192 = vld [vmem:[%s166 + $0x90] sm:$0xff]
      %v193 = vld [vmem:[%s166 + $0x98] sm:$0xff]
      %v194 = vld [vmem:[%s166 + $0xa0] sm:$0xff]
      %v195 = vld [vmem:[%s166 + $0xa8] sm:$0xff]
      %v196 = vld [vmem:[%s166 + $0xb0] sm:$0xff]
      %v197 = vld [vmem:[%s166 + $0xb8] sm:$0xff]
      %v198 = vld [vmem:[%s166 + $0xc0] sm:$0xff]
      %v199 = vld [vmem:[%s166 + $0xc8] sm:$0xff]
      %v200 = vld [vmem:[%s166 + $0xd0] sm:$0xff]
      %v201 = vld [vmem:[%s166 + $0xd8] sm:$0xff]
      %v202 = vld [vmem:[%s166 + $0xe0] sm:$0xff]
      %v203 = vld [vmem:[%s166 + $0xe8] sm:$0xff]
      %v204 = vld [vmem:[%s166 + $0xf0] sm:$0xff]
      %v205 = vld [vmem:[%s166 + $0xf8] sm:$0xff]
      %vm206 = vcmask 785408
      %v207 = vsel %vm206, %v174, 0.0
      %208 = vadd.xlane.f32.xlu0 %v207
      %v209 = vpop.xlane.xlu0 %208
      %v210 = vsel %vm206, %v175, 0.0
      %211 = vadd.xlane.f32.xlu0 %v210
      %v212 = vpop.xlane.xlu0 %211
      %v213 = vsel %vm206, %v176, 0.0
      %214 = vadd.xlane.f32.xlu0 %v213
      %v215 = vpop.xlane.xlu0 %214
      %v216 = vsel %vm206, %v177, 0.0
      %217 = vadd.xlane.f32.xlu0 %v216
      %v218 = vpop.xlane.xlu0 %217
      %v219 = vsel %vm206, %v178, 0.0
      %220 = vadd.xlane.f32.xlu0 %v219
      %v221 = vpop.xlane.xlu0 %220
      %v222 = vsel %vm206, %v179, 0.0
      %223 = vadd.xlane.f32.xlu0 %v222
      %v224 = vpop.xlane.xlu0 %223
      %v225 = vsel %vm206, %v180, 0.0
      %226 = vadd.xlane.f32.xlu0 %v225
      %v227 = vpop.xlane.xlu0 %226
      %v228 = vsel %vm206, %v181, 0.0
      %229 = vadd.xlane.f32.xlu0 %v228
      %v230 = vpop.xlane.xlu0 %229
      %v231 = vsel %vm206, %v182, 0.0
      %232 = vadd.xlane.f32.xlu0 %v231
      %v233 = vpop.xlane.xlu0 %232
      %v234 = vsel %vm206, %v183, 0.0
      %235 = vadd.xlane.f32.xlu0 %v234
      %v236 = vpop.xlane.xlu0 %235
      %v237 = vsel %vm206, %v184, 0.0
      %238 = vadd.xlane.f32.xlu0 %v237
      %v239 = vpop.xlane.xlu0 %238
      %v240 = vsel %vm206, %v185, 0.0
      %241 = vadd.xlane.f32.xlu0 %v240
      %v242 = vpop.xlane.xlu0 %241
      %v243 = vsel %vm206, %v186, 0.0
      %244 = vadd.xlane.f32.xlu0 %v243
      %v245 = vpop.xlane.xlu0 %244
      %v246 = vsel %vm206, %v187, 0.0
      %247 = vadd.xlane.f32.xlu0 %v246
      %v248 = vpop.xlane.xlu0 %247
      %v249 = vsel %vm206, %v188, 0.0
      %250 = vadd.xlane.f32.xlu0 %v249
      %v251 = vpop.xlane.xlu0 %250
      %v252 = vsel %vm206, %v189, 0.0
      %253 = vadd.xlane.f32.xlu0 %v252
      %v254 = vpop.xlane.xlu0 %253
      %v255 = vsel %vm206, %v190, 0.0
      %256 = vadd.xlane.f32.xlu0 %v255
      %v257 = vpop.xlane.xlu0 %256
      %v258 = vsel %vm206, %v191, 0.0
      %259 = vadd.xlane.f32.xlu0 %v258
      %v260 = vpop.xlane.xlu0 %259
      %v261 = vsel %vm206, %v192, 0.0
      %262 = vadd.xlane.f32.xlu0 %v261
      %v263 = vpop.xlane.xlu0 %262
      %v264 = vsel %vm206, %v193, 0.0
      %265 = vadd.xlane.f32.xlu0 %v264
      %v266 = vpop.xlane.xlu0 %265
      %v267 = vsel %vm206, %v194, 0.0
      %268 = vadd.xlane.f32.xlu0 %v267
      %v269 = vpop.xlane.xlu0 %268
      %v270 = vsel %vm206, %v195, 0.0
      %271 = vadd.xlane.f32.xlu0 %v270
      %v272 = vpop.xlane.xlu0 %271
      %v273 = vsel %vm206, %v196, 0.0
      %274 = vadd.xlane.f32.xlu0 %v273
      %v275 = vpop.xlane.xlu0 %274
      %v276 = vsel %vm206, %v197, 0.0
      %277 = vadd.xlane.f32.xlu0 %v276
      %v278 = vpop.xlane.xlu0 %277
      %v279 = vsel %vm206, %v198, 0.0
      %280 = vadd.xlane.f32.xlu0 %v279
      %v281 = vpop.xlane.xlu0 %280
      %v282 = vsel %vm206, %v199, 0.0
      %283 = vadd.xlane.f32.xlu0 %v282
      %v284 = vpop.xlane.xlu0 %283
      %v285 = vsel %vm206, %v200, 0.0
      %286 = vadd.xlane.f32.xlu0 %v285
      %v287 = vpop.xlane.xlu0 %286
      %v288 = vsel %vm206, %v201, 0.0
      %289 = vadd.xlane.f32.xlu0 %v288
      %v290 = vpop.xlane.xlu0 %289
      %v291 = vsel %vm206, %v202, 0.0
      %292 = vadd.xlane.f32.xlu0 %v291
      %v293 = vpop.xlane.xlu0 %292
      %v294 = vsel %vm206, %v203, 0.0
      %295 = vadd.xlane.f32.xlu0 %v294
      %v296 = vpop.xlane.xlu0 %295
      %v297 = vsel %vm206, %v204, 0.0
      %298 = vadd.xlane.f32.xlu0 %v297
      %v299 = vpop.xlane.xlu0 %298
      %v300 = vsel %vm206, %v205, 0.0
      %301 = vadd.xlane.f32.xlu0 %v300
      %v302 = vpop.xlane.xlu0 %301
      %v303 = vrcp.pop 96.0
      %v304 = vmul.f32 %v209, %v303
      %v305 = vmul.f32 %v212, %v303
      %v306 = vmul.f32 %v215, %v303
      %v307 = vmul.f32 %v218, %v303
      %v308 = vmul.f32 %v221, %v303
      %v309 = vmul.f32 %v224, %v303
      %v310 = vmul.f32 %v227, %v303
      %v311 = vmul.f32 %v230, %v303
      %v312 = vmul.f32 %v233, %v303
      %v313 = vmul.f32 %v236, %v303
      %v314 = vmul.f32 %v239, %v303
      %v315 = vmul.f32 %v242, %v303
      %v316 = vmul.f32 %v245, %v303
      %v317 = vmul.f32 %v248, %v303
      %v318 = vmul.f32 %v251, %v303
      %v319 = vmul.f32 %v254, %v303
      %v320 = vmul.f32 %v257, %v303
      %v321 = vmul.f32 %v260, %v303
      %v322 = vmul.f32 %v263, %v303
      %v323 = vmul.f32 %v266, %v303
      %v324 = vmul.f32 %v269, %v303
      %v325 = vmul.f32 %v272, %v303
      %v326 = vmul.f32 %v275, %v303
      %v327 = vmul.f32 %v278, %v303
      %v328 = vmul.f32 %v281, %v303
      %v329 = vmul.f32 %v284, %v303
      %v330 = vmul.f32 %v287, %v303
      %v331 = vmul.f32 %v290, %v303
      %v332 = vmul.f32 %v293, %v303
      %v333 = vmul.f32 %v296, %v303
      %v334 = vmul.f32 %v299, %v303
      %v335 = vmul.f32 %v302, %v303
      %v336 = vsub.f32 %v174, %v304
      %v337 = vsub.f32 %v175, %v305
      %v338 = vsub.f32 %v176, %v306
      %v339 = vsub.f32 %v177, %v307
      %v340 = vsub.f32 %v178, %v308
      %v341 = vsub.f32 %v179, %v309
      %v342 = vsub.f32 %v180, %v310
      %v343 = vsub.f32 %v181, %v311
      %v344 = vsub.f32 %v182, %v312
      %v345 = vsub.f32 %v183, %v313
      %v346 = vsub.f32 %v184, %v314
      %v347 = vsub.f32 %v185, %v315
      %v348 = vsub.f32 %v186, %v316
      %v349 = vsub.f32 %v187, %v317
      %v350 = vsub.f32 %v188, %v318
      %v351 = vsub.f32 %v189, %v319
      %v352 = vsub.f32 %v190, %v320
      %v353 = vsub.f32 %v191, %v321
      %v354 = vsub.f32 %v192, %v322
      %v355 = vsub.f32 %v193, %v323
      %v356 = vsub.f32 %v194, %v324
      %v357 = vsub.f32 %v195, %v325
      %v358 = vsub.f32 %v196, %v326
      %v359 = vsub.f32 %v197, %v327
      %v360 = vsub.f32 %v198, %v328
      %v361 = vsub.f32 %v199, %v329
      %v362 = vsub.f32 %v200, %v330
      %v363 = vsub.f32 %v201, %v331
      %v364 = vsub.f32 %v202, %v332
      %v365 = vsub.f32 %v203, %v333
      %v366 = vsub.f32 %v204, %v334
      %v367 = vsub.f32 %v205, %v335
      %v368 = vmul.f32 %v336, %v336
      %v369 = vmul.f32 %v337, %v337
      %v370 = vmul.f32 %v338, %v338
      %v371 = vmul.f32 %v339, %v339
      %v372 = vmul.f32 %v340, %v340
      %v373 = vmul.f32 %v341, %v341
      %v374 = vmul.f32 %v342, %v342
      %v375 = vmul.f32 %v343, %v343
      %v376 = vmul.f32 %v344, %v344
      %v377 = vmul.f32 %v345, %v345
      %v378 = vmul.f32 %v346, %v346
      %v379 = vmul.f32 %v347, %v347
      %v380 = vmul.f32 %v348, %v348
      %v381 = vmul.f32 %v349, %v349
      %v382 = vmul.f32 %v350, %v350
      %v383 = vmul.f32 %v351, %v351
      %v384 = vmul.f32 %v352, %v352
      %v385 = vmul.f32 %v353, %v353
      %v386 = vmul.f32 %v354, %v354
      %v387 = vmul.f32 %v355, %v355
      %v388 = vmul.f32 %v356, %v356
      %v389 = vmul.f32 %v357, %v357
      %v390 = vmul.f32 %v358, %v358
      %v391 = vmul.f32 %v359, %v359
      %v392 = vmul.f32 %v360, %v360
      %v393 = vmul.f32 %v361, %v361
      %v394 = vmul.f32 %v362, %v362
      %v395 = vmul.f32 %v363, %v363
      %v396 = vmul.f32 %v364, %v364
      %v397 = vmul.f32 %v365, %v365
      %v398 = vmul.f32 %v366, %v366
      %v399 = vmul.f32 %v367, %v367
      %v400 = vsel %vm206, %v368, 0.0
      %401 = vadd.xlane.f32.xlu0 %v400
      %v402 = vpop.xlane.xlu0 %401
      %v403 = vsel %vm206, %v369, 0.0
      %404 = vadd.xlane.f32.xlu0 %v403
      %v405 = vpop.xlane.xlu0 %404
      %v406 = vsel %vm206, %v370, 0.0
      %407 = vadd.xlane.f32.xlu0 %v406
      %v408 = vpop.xlane.xlu0 %407
      %v409 = vsel %vm206, %v371, 0.0
      %410 = vadd.xlane.f32.xlu0 %v409
      %v411 = vpop.xlane.xlu0 %410
      %v412 = vsel %vm206, %v372, 0.0
      %413 = vadd.xlane.f32.xlu0 %v412
      %v414 = vpop.xlane.xlu0 %413
      %v415 = vsel %vm206, %v373, 0.0
      %416 = vadd.xlane.f32.xlu0 %v415
      %v417 = vpop.xlane.xlu0 %416
      %v418 = vsel %vm206, %v374, 0.0
      %419 = vadd.xlane.f32.xlu0 %v418
      %v420 = vpop.xlane.xlu0 %419
      %v421 = vsel %vm206, %v375, 0.0
      %422 = vadd.xlane.f32.xlu0 %v421
      %v423 = vpop.xlane.xlu0 %422
      %v424 = vsel %vm206, %v376, 0.0
      %425 = vadd.xlane.f32.xlu0 %v424
      %v426 = vpop.xlane.xlu0 %425
      %v427 = vsel %vm206, %v377, 0.0
      %428 = vadd.xlane.f32.xlu0 %v427
      %v429 = vpop.xlane.xlu0 %428
      %v430 = vsel %vm206, %v378, 0.0
      %431 = vadd.xlane.f32.xlu0 %v430
      %v432 = vpop.xlane.xlu0 %431
      %v433 = vsel %vm206, %v379, 0.0
      %434 = vadd.xlane.f32.xlu0 %v433
      %v435 = vpop.xlane.xlu0 %434
      %v436 = vsel %vm206, %v380, 0.0
      %437 = vadd.xlane.f32.xlu0 %v436
      %v438 = vpop.xlane.xlu0 %437
      %v439 = vsel %vm206, %v381, 0.0
      %440 = vadd.xlane.f32.xlu0 %v439
      %v441 = vpop.xlane.xlu0 %440
      %v442 = vsel %vm206, %v382, 0.0
      %443 = vadd.xlane.f32.xlu0 %v442
      %v444 = vpop.xlane.xlu0 %443
      %v445 = vsel %vm206, %v383, 0.0
      %446 = vadd.xlane.f32.xlu0 %v445
      %v447 = vpop.xlane.xlu0 %446
      %v448 = vsel %vm206, %v384, 0.0
      %449 = vadd.xlane.f32.xlu0 %v448
      %v450 = vpop.xlane.xlu0 %449
      %v451 = vsel %vm206, %v385, 0.0
      %452 = vadd.xlane.f32.xlu0 %v451
      %v453 = vpop.xlane.xlu0 %452
      %v454 = vsel %vm206, %v386, 0.0
      %455 = vadd.xlane.f32.xlu0 %v454
      %v456 = vpop.xlane.xlu0 %455
      %v457 = vsel %vm206, %v387, 0.0
      %458 = vadd.xlane.f32.xlu0 %v457
      %v459 = vpop.xlane.xlu0 %458
      %v460 = vsel %vm206, %v388, 0.0
      %461 = vadd.xlane.f32.xlu0 %v460
      %v462 = vpop.xlane.xlu0 %461
      %v463 = vsel %vm206, %v389, 0.0
      %464 = vadd.xlane.f32.xlu0 %v463
      %v465 = vpop.xlane.xlu0 %464
      %v466 = vsel %vm206, %v390, 0.0
      %467 = vadd.xlane.f32.xlu0 %v466
      %v468 = vpop.xlane.xlu0 %467
      %v469 = vsel %vm206, %v391, 0.0
      %470 = vadd.xlane.f32.xlu0 %v469
      %v471 = vpop.xlane.xlu0 %470
      %v472 = vsel %vm206, %v392, 0.0
      %473 = vadd.xlane.f32.xlu0 %v472
      %v474 = vpop.xlane.xlu0 %473
      %v475 = vsel %vm206, %v393, 0.0
      %476 = vadd.xlane.f32.xlu0 %v475
      %v477 = vpop.xlane.xlu0 %476
      %v478 = vsel %vm206, %v394, 0.0
      %479 = vadd.xlane.f32.xlu0 %v478
      %v480 = vpop.xlane.xlu0 %479
      %v481 = vsel %vm206, %v395, 0.0
      %482 = vadd.xlane.f32.xlu0 %v481
      %v483 = vpop.xlane.xlu0 %482
      %v484 = vsel %vm206, %v396, 0.0
      %485 = vadd.xlane.f32.xlu0 %v484
      %v486 = vpop.xlane.xlu0 %485
      %v487 = vsel %vm206, %v397, 0.0
      %488 = vadd.xlane.f32.xlu0 %v487
      %v489 = vpop.xlane.xlu0 %488
      %v490 = vsel %vm206, %v398, 0.0
      %491 = vadd.xlane.f32.xlu0 %v490
      %v492 = vpop.xlane.xlu0 %491
      %v493 = vsel %vm206, %v399, 0.0
      %494 = vadd.xlane.f32.xlu0 %v493
      %v495 = vpop.xlane.xlu0 %494
      %v496 = vmul.f32 %v402, %v303
      %v497 = vmul.f32 %v405, %v303
      %v498 = vmul.f32 %v408, %v303
      %v499 = vmul.f32 %v411, %v303
      %v500 = vmul.f32 %v414, %v303
      %v501 = vmul.f32 %v417, %v303
      %v502 = vmul.f32 %v420, %v303
      %v503 = vmul.f32 %v423, %v303
      %v504 = vmul.f32 %v426, %v303
      %v505 = vmul.f32 %v429, %v303
      %v506 = vmul.f32 %v432, %v303
      %v507 = vmul.f32 %v435, %v303
      %v508 = vmul.f32 %v438, %v303
      %v509 = vmul.f32 %v441, %v303
      %v510 = vmul.f32 %v444, %v303
      %v511 = vmul.f32 %v447, %v303
      %v512 = vmul.f32 %v450, %v303
      %v513 = vmul.f32 %v453, %v303
      %v514 = vmul.f32 %v456, %v303
      %v515 = vmul.f32 %v459, %v303
      %v516 = vmul.f32 %v462, %v303
      %v517 = vmul.f32 %v465, %v303
      %v518 = vmul.f32 %v468, %v303
      %v519 = vmul.f32 %v471, %v303
      %v520 = vmul.f32 %v474, %v303
      %v521 = vmul.f32 %v477, %v303
      %v522 = vmul.f32 %v480, %v303
      %v523 = vmul.f32 %v483, %v303
      %v524 = vmul.f32 %v486, %v303
      %v525 = vmul.f32 %v489, %v303
      %v526 = vmul.f32 %v492, %v303
      %v527 = vmul.f32 %v495, %v303
      %v528 = vadd.f32 %v496, 1e-05
      %v529 = vadd.f32 %v497, 1e-05
      %v530 = vadd.f32 %v498, 1e-05
      %v531 = vadd.f32 %v499, 1e-05
      %v532 = vadd.f32 %v500, 1e-05
      %v533 = vadd.f32 %v501, 1e-05
      %v534 = vadd.f32 %v502, 1e-05
      %v535 = vadd.f32 %v503, 1e-05
      %v536 = vadd.f32 %v504, 1e-05
      %v537 = vadd.f32 %v505, 1e-05
      %v538 = vadd.f32 %v506, 1e-05
      %v539 = vadd.f32 %v507, 1e-05
      %v540 = vadd.f32 %v508, 1e-05
      %v541 = vadd.f32 %v509, 1e-05
      %v542 = vadd.f32 %v510, 1e-05
      %v543 = vadd.f32 %v511, 1e-05
      %v544 = vadd.f32 %v512, 1e-05
      %v545 = vadd.f32 %v513, 1e-05
      %v546 = vadd.f32 %v514, 1e-05
      %v547 = vadd.f32 %v515, 1e-05
      %v548 = vadd.f32 %v516, 1e-05
      %v549 = vadd.f32 %v517, 1e-05
      %v550 = vadd.f32 %v518, 1e-05
      %v551 = vadd.f32 %v519, 1e-05
      %v552 = vadd.f32 %v520, 1e-05
      %v553 = vadd.f32 %v521, 1e-05
      %v554 = vadd.f32 %v522, 1e-05
      %v555 = vadd.f32 %v523, 1e-05
      %v556 = vadd.f32 %v524, 1e-05
      %v557 = vadd.f32 %v525, 1e-05
      %v558 = vadd.f32 %v526, 1e-05
      %v559 = vadd.f32 %v527, 1e-05
      %v560 = vrsqrt.pop %v528
      %v561 = vrsqrt.pop %v529
      %v562 = vrsqrt.pop %v530
      %v563 = vrsqrt.pop %v531
      %v564 = vrsqrt.pop %v532
      %v565 = vrsqrt.pop %v533
      %v566 = vrsqrt.pop %v534
      %v567 = vrsqrt.pop %v535
      %v568 = vrsqrt.pop %v536
      %v569 = vrsqrt.pop %v537
      %v570 = vrsqrt.pop %v538
      %v571 = vrsqrt.pop %v539
      %v572 = vrsqrt.pop %v540
      %v573 = vrsqrt.pop %v541
      %v574 = vrsqrt.pop %v542
      %v575 = vrsqrt.pop %v543
      %v576 = vrsqrt.pop %v544
      %v577 = vrsqrt.pop %v545
      %v578 = vrsqrt.pop %v546
      %v579 = vrsqrt.pop %v547
      %v580 = vrsqrt.pop %v548
      %v581 = vrsqrt.pop %v549
      %v582 = vrsqrt.pop %v550
      %v583 = vrsqrt.pop %v551
      %v584 = vrsqrt.pop %v552
      %v585 = vrsqrt.pop %v553
      %v586 = vrsqrt.pop %v554
      %v587 = vrsqrt.pop %v555
      %v588 = vrsqrt.pop %v556
      %v589 = vrsqrt.pop %v557
      %v590 = vrsqrt.pop %v558
      %v591 = vrsqrt.pop %v559
      %v592 = vmul.f32 %v336, %v560
      %v593 = vmul.f32 %v337, %v561
      %v594 = vmul.f32 %v338, %v562
      %v595 = vmul.f32 %v339, %v563
      %v596 = vmul.f32 %v340, %v564
      %v597 = vmul.f32 %v341, %v565
      %v598 = vmul.f32 %v342, %v566
      %v599 = vmul.f32 %v343, %v567
      %v600 = vmul.f32 %v344, %v568
      %v601 = vmul.f32 %v345, %v569
      %v602 = vmul.f32 %v346, %v570
      %v603 = vmul.f32 %v347, %v571
      %v604 = vmul.f32 %v348, %v572
      %v605 = vmul.f32 %v349, %v573
      %v606 = vmul.f32 %v350, %v574
      %v607 = vmul.f32 %v351, %v575
      %v608 = vmul.f32 %v352, %v576
      %v609 = vmul.f32 %v353, %v577
      %v610 = vmul.f32 %v354, %v578
      %v611 = vmul.f32 %v355, %v579
      %v612 = vmul.f32 %v356, %v580
      %v613 = vmul.f32 %v357, %v581
      %v614 = vmul.f32 %v358, %v582
      %v615 = vmul.f32 %v359, %v583
      %v616 = vmul.f32 %v360, %v584
      %v617 = vmul.f32 %v361, %v585
      %v618 = vmul.f32 %v362, %v586
      %v619 = vmul.f32 %v363, %v587
      %v620 = vmul.f32 %v364, %v588
      %v621 = vmul.f32 %v365, %v589
      %v622 = vmul.f32 %v366, %v590
      %v623 = vmul.f32 %v367, %v591
      %v624 = vld [vmem:[%s1] sm:$0x1]
      %v626 = vlaneseq
      %v627 = vshrl.u32 %v626, 7
      %v628 = vsub.s32 0, %v627
      %v629 = vrot.slane %v624, %v628
      %v631 = vmul.f32 %v592, %v629
      %v632 = vmul.f32 %v593, %v629
      %v633 = vmul.f32 %v594, %v629
      %v634 = vmul.f32 %v595, %v629
      %v635 = vmul.f32 %v596, %v629
      %v636 = vmul.f32 %v597, %v629
      %v637 = vmul.f32 %v598, %v629
      %v638 = vmul.f32 %v599, %v629
      %v639 = vmul.f32 %v600, %v629
      %v640 = vmul.f32 %v601, %v629
      %v641 = vmul.f32 %v602, %v629
      %v642 = vmul.f32 %v603, %v629
      %v643 = vmul.f32 %v604, %v629
      %v644 = vmul.f32 %v605, %v629
      %v645 = vmul.f32 %v606, %v629
      %v646 = vmul.f32 %v607, %v629
      %v647 = vmul.f32 %v608, %v629
      %v648 = vmul.f32 %v609, %v629
      %v649 = vmul.f32 %v610, %v629
      %v650 = vmul.f32 %v611, %v629
      %v651 = vmul.f32 %v612, %v629
      %v652 = vmul.f32 %v613, %v629
      %v653 = vmul.f32 %v614, %v629
      %v654 = vmul.f32 %v615, %v629
      %v655 = vmul.f32 %v616, %v629
      %v656 = vmul.f32 %v617, %v629
      %v657 = vmul.f32 %v618, %v629
      %v658 = vmul.f32 %v619, %v629
      %v659 = vmul.f32 %v620, %v629
      %v660 = vmul.f32 %v621, %v629
      %v661 = vmul.f32 %v622, %v629
      %v662 = vmul.f32 %v623, %v629
      %v663 = vld [vmem:[%s2] sm:$0x1]
      %v665 = vlaneseq
      %v666 = vshrl.u32 %v665, 7
      %v667 = vsub.s32 0, %v666
      %v668 = vrot.slane %v663, %v667
      %v670 = vadd.f32 %v631, %v668
      %v671 = vadd.f32 %v632, %v668
      %v672 = vadd.f32 %v633, %v668
      %v673 = vadd.f32 %v634, %v668
      %v674 = vadd.f32 %v635, %v668
      %v675 = vadd.f32 %v636, %v668
      %v676 = vadd.f32 %v637, %v668
      %v677 = vadd.f32 %v638, %v668
      %v678 = vadd.f32 %v639, %v668
      %v679 = vadd.f32 %v640, %v668
      %v680 = vadd.f32 %v641, %v668
      %v681 = vadd.f32 %v642, %v668
      %v682 = vadd.f32 %v643, %v668
      %v683 = vadd.f32 %v644, %v668
      %v684 = vadd.f32 %v645, %v668
      %v685 = vadd.f32 %v646, %v668
      %v686 = vadd.f32 %v647, %v668
      %v687 = vadd.f32 %v648, %v668
      %v688 = vadd.f32 %v649, %v668
      %v689 = vadd.f32 %v650, %v668
      %v690 = vadd.f32 %v651, %v668
      %v691 = vadd.f32 %v652, %v668
      %v692 = vadd.f32 %v653, %v668
      %v693 = vadd.f32 %v654, %v668
      %v694 = vadd.f32 %v655, %v668
      %v695 = vadd.f32 %v656, %v668
      %v696 = vadd.f32 %v657, %v668
      %v697 = vadd.f32 %v658, %v668
      %v698 = vadd.f32 %v659, %v668
      %v699 = vadd.f32 %v660, %v668
      %v700 = vadd.f32 %v661, %v668
      %v701 = vadd.f32 %v662, %v668
      %702 = vst.msk [vmem:[%s172] sm:$0xff] %vm206, %v670
      %703 = vst.msk [vmem:[%s172 + $0x8] sm:$0xff] %vm206, %v671
      %704 = vst.msk [vmem:[%s172 + $0x10] sm:$0xff] %vm206, %v672
      %705 = vst.msk [vmem:[%s172 + $0x18] sm:$0xff] %vm206, %v673
      %706 = vst.msk [vmem:[%s172 + $0x20] sm:$0xff] %vm206, %v674
      %707 = vst.msk [vmem:[%s172 + $0x28] sm:$0xff] %vm206, %v675
      %708 = vst.msk [vmem:[%s172 + $0x30] sm:$0xff] %vm206, %v676
      %709 = vst.msk [vmem:[%s172 + $0x38] sm:$0xff] %vm206, %v677
      %710 = vst.msk [vmem:[%s172 + $0x40] sm:$0xff] %vm206, %v678
      %711 = vst.msk [vmem:[%s172 + $0x48] sm:$0xff] %vm206, %v679
      %712 = vst.msk [vmem:[%s172 + $0x50] sm:$0xff] %vm206, %v680
      %713 = vst.msk [vmem:[%s172 + $0x58] sm:$0xff] %vm206, %v681
      %714 = vst.msk [vmem:[%s172 + $0x60] sm:$0xff] %vm206, %v682
      %715 = vst.msk [vmem:[%s172 + $0x68] sm:$0xff] %vm206, %v683
      %716 = vst.msk [vmem:[%s172 + $0x70] sm:$0xff] %vm206, %v684
      %717 = vst.msk [vmem:[%s172 + $0x78] sm:$0xff] %vm206, %v685
      %718 = vst.msk [vmem:[%s172 + $0x80] sm:$0xff] %vm206, %v686
      %719 = vst.msk [vmem:[%s172 + $0x88] sm:$0xff] %vm206, %v687
      %720 = vst.msk [vmem:[%s172 + $0x90] sm:$0xff] %vm206, %v688
      %721 = vst.msk [vmem:[%s172 + $0x98] sm:$0xff] %vm206, %v689
      %722 = vst.msk [vmem:[%s172 + $0xa0] sm:$0xff] %vm206, %v690
      %723 = vst.msk [vmem:[%s172 + $0xa8] sm:$0xff] %vm206, %v691
      %724 = vst.msk [vmem:[%s172 + $0xb0] sm:$0xff] %vm206, %v692
      %725 = vst.msk [vmem:[%s172 + $0xb8] sm:$0xff] %vm206, %v693
      %726 = vst.msk [vmem:[%s172 + $0xc0] sm:$0xff] %vm206, %v694
      %727 = vst.msk [vmem:[%s172 + $0xc8] sm:$0xff] %vm206, %v695
      %728 = vst.msk [vmem:[%s172 + $0xd0] sm:$0xff] %vm206, %v696
      %729 = vst.msk [vmem:[%s172 + $0xd8] sm:$0xff] %vm206, %v697
      %730 = vst.msk [vmem:[%s172 + $0xe0] sm:$0xff] %vm206, %v698
      %731 = vst.msk [vmem:[%s172 + $0xe8] sm:$0xff] %vm206, %v699
      %732 = vst.msk [vmem:[%s172 + $0xf0] sm:$0xff] %vm206, %v700
      %733 = vst.msk [vmem:[%s172 + $0xf8] sm:$0xff] %vm206, %v701
      %s734 = smul.u32 32, %s14
      %p735 = scmp.lt.s32.totalorder %s734, 415
      %s736 = scalar_select %p735, %s734, 415
      %s737 = smul.addr %s736, 8
      %s738 = scalar_lea.vmem %s3, %s737
      // Predicated region
      $region33: #{patch_embed_impl.3} parent=31 // pred_check
        %p739 = pneg %p100
      $region34: #{patch_embed_impl.3} parent=31 // pred_check_branch
        %741 = sbr.rel (%p739) target = $region36
      $region35: #{patch_embed_impl.3} parent=31 // pred_region
        %s742 = smul.u32 32, %s14
      $region36: #{patch_embed_impl.3} parent=31 // pred_fallthru
        _
    $region32: #{patch_embed_impl.3} parent=5 // pred_fallthru
      _
    %p743 = scmp.le.s32.totalorder 2, %s9
    // Predicated region
    $region37: #{patch_embed_impl.3} parent=5 // pred_check
      %p744 = pneg %p743
    $region38: #{patch_embed_impl.3} parent=5 // pred_check_branch
      %746 = sbr.rel (%p744) target = $region40
    $region39: #{patch_embed_impl.3} parent=5 // pred_region
      %s747 = ssub.s32 %s9, 2
      // Predicated region
      $region41: #{patch_embed_impl.3} parent=39 // pred_check
        %p748 = pneg %p106
      $region42: #{patch_embed_impl.3} parent=39 // pred_check_branch
        %750 = sbr.rel (%p748) target = $region44
      $region43: #{patch_embed_impl.3} parent=39 // pred_region
        %s751 = smul.u32 32, %s15
        %p752 = scmp.lt.s32.totalorder %s751, 415
        %s753 = scalar_select %p752, %s751, 415
        %s754 = smul.addr %s753, 8
        %s755 = scalar_lea.vmem %s3, %s754
      $region44: #{patch_embed_impl.3} parent=39 // pred_fallthru
        _
    $region40: #{patch_embed_impl.3} parent=5 // pred_fallthru
      _
  $region6: #{patch_embed_impl.3} parent=0 // loop_footer
    %s13 = sadd.s32 1, %s9
  $region7: #{patch_embed_impl.3} parent=0 // loop_footer_branch
    %8 = sbr.rel target = $region3
  $region8: #{patch_embed_impl.3} parent=0 // loop_exit
    _

</llo_original>
